<compile_context>
chip_gen: v6e
topology: v6e:2x2x1
jax: 0.10.0
libtpu: 0.0.40
codegen_flags: <defaults>
</compile_context>

<pallas_src>
import functools

import jax
import jax.numpy as jnp
from jax.experimental import pallas as pl
from jax.experimental.pallas import tpu as pltpu


# ----------------------------------------------------------------------------
# In-kernel helpers
# ----------------------------------------------------------------------------
def _build_im2col(src_f32, mask_ref, dst_ref, C, H, W):
    """src_f32: (C, H*W) f32.  Writes the (9*C, H*W) bf16 im2col operand.

    Tap t = dy*3+dx needs, at output position q, the input element q + s with
    s = (dy-1)*W + (dx-1).  The shift is one pltpu.roll (XLU lane rotate);
    out-of-image reads are zeroed with the precomputed per-tap masks, which
    also kills every wrap-around element of the roll.
    """
    HW = H * W
    for dy in range(3):
        for dx in range(3):
            t = dy * 3 + dx
            s = (dy - 1) * W + (dx - 1)
            if s == 0:
                xs = src_f32
            else:
                # roll(x, k)[q] = x[(q - k) mod HW]  ==>  k = -s gives x[q + s]
                xs = pltpu.roll(src_f32, shift=(-s) % HW, axis=1)
            if not (dy == 1 and dx == 1):
                xs = xs * mask_ref[t:t + 1, :]        # zero padded-halo reads
            dst_ref[t * C:(t + 1) * C, :] = xs.astype(jnp.bfloat16)


def _gn_relu(acc, gamma, beta, groups, eps):
    """GroupNorm (per sample, this block is one sample) + ReLU on (Cout, HW) f32."""
    Cout, HW = acc.shape
    cpg = Cout // groups
    inv_n = 1.0 / (cpg * HW)
    s1 = jnp.sum(acc, axis=1, keepdims=True)                      # (Cout, 1)
    if cpg == 1:
        mean = s1 * inv_n
    else:
        g1 = jnp.sum(s1.reshape(groups, cpg), axis=1, keepdims=True)
        mean = jnp.broadcast_to(g1, (groups, cpg)).reshape(Cout, 1) * inv_n
    d = acc - mean                                                # two-pass variance
    s2 = jnp.sum(d * d, axis=1, keepdims=True)
    if cpg == 1:
        var = s2 * inv_n
    else:
        g2 = jnp.sum(s2.reshape(groups, cpg), axis=1, keepdims=True)
        var = jnp.broadcast_to(g2, (groups, cpg)).reshape(Cout, 1) * inv_n
    scale = jax.lax.rsqrt(var + eps) * gamma
    return jnp.maximum(d * scale + beta, 0.0)


# ----------------------------------------------------------------------------
# Fused kernel: conv_input [+bias] + GN + ReLU  (+state)  + conv1 + GN + ReLU
# ----------------------------------------------------------------------------
def _fused_kernel(x_ref, w_in_ref, w1_ref, mask_ref,
                  gamma_in_ref, beta_in_ref, gamma1_ref, beta1_ref, *rest,
                  H, W, Cin_pad, Cout, groups, eps, add_bias, has_state):
    i = 0
    bias_ref = None
    if add_bias:
        bias_ref = rest[i]; i += 1
    state_ref = None
    if has_state:
        state_ref = rest[i]; i += 1
    o_ref, xcol1_ref, xcol2_ref = rest[i], rest[i + 1], rest[i + 2]

    # ---- stage 1: conv_input (3x3, stride 1, pad 1) + GroupNorm + ReLU ----
    x = x_ref[...]                                                # (Cin_pad, HW) f32
    _build_im2col(x, mask_ref, xcol1_ref, Cin_pad, H, W)
    acc = jnp.dot(w_in_ref[...], xcol1_ref[...],
                  preferred_element_type=jnp.float32)             # (Cout, HW)
    if add_bias:                                                  # cpg==1 -> bias cancels in GN
        acc = acc + bias_ref[...]
    h = _gn_relu(acc, gamma_in_ref[...], beta_in_ref[...], groups, eps)

    # ---- skip connection with the recurrent state ----
    if has_state:
        h = h + state_ref[...]

    # ---- stage 2: conv1 (3x3, pad 1, bias=False) + GroupNorm + ReLU ----
    _build_im2col(h, mask_ref, xcol2_ref, Cout, H, W)
    acc2 = jnp.dot(w1_ref[...], xcol2_ref[...],
                   preferred_element_type=jnp.float32)            # (Cout, HW)
    o_ref[...] = _gn_relu(acc2, gamma1_ref[...], beta1_ref[...], groups, eps)


# Single conv+GN+ReLU kernel for the `inp is None` branch (skip comes straight
# from the state / zeros; conv_input is bypassed exactly as in the PyTorch module).
def _conv_gn_relu_kernel(x_ref, w_ref, mask_ref, gamma_ref, beta_ref,
                         o_ref, xcol_ref, *, H, W, C, groups, eps):
    _build_im2col(x_ref[...], mask_ref, xcol_ref, C, H, W)
    acc = jnp.dot(w_ref[...], xcol_ref[...], preferred_element_type=jnp.float32)
    o_ref[...] = _gn_relu(acc, gamma_ref[...], beta_ref[...], groups, eps)


# ----------------------------------------------------------------------------
# Jitted device wrappers (one pallas_call each; tiny reshapes/pads fuse under jit)
# ----------------------------------------------------------------------------
_VMEM_LIMIT = 32 * 1024 * 1024   # explicit scoped-VMEM budget (safe on v5e/v6e/v7x)


@functools.partial(jax.jit,
                   static_argnames=("groups", "eps", "cin_pad", "has_state", "add_bias"))
def _fused_block(x, state, w_in, w1, mask, b_in,
                 gamma_in, beta_in, gamma1, beta1,
                 *, groups, eps, cin_pad, has_state, add_bias):
    N, Cin, H, W = x.shape
    Cout = gamma1.shape[0]
    HW = H * W
    K1, K2 = 9 * cin_pad, 9 * Cout

    xr = x.reshape(N, Cin, HW)
    if cin_pad != Cin:                    # pad channels once -> aligned (16, HW) block
        xr = jnp.pad(xr, ((0, 0), (0, cin_pad - Cin), (0, 0)))

    kernel = functools.partial(_fused_kernel, H=H, W=W, Cin_pad=cin_pad, Cout=Cout,
                               groups=groups, eps=eps, add_bias=add_bias,
                               has_state=has_state)

    in_specs = [
        pl.BlockSpec((None, cin_pad, HW), lambda n: (n, 0, 0)),   # input sample
        pl.BlockSpec((Cout, K1), lambda n: (0, 0)),               # conv_input weights
        pl.BlockSpec((Cout, K2), lambda n: (0, 0)),               # conv1 weights
        pl.BlockSpec((9, HW), lambda n: (0, 0)),                  # halo masks
        pl.BlockSpec((Cout, 1), lambda n: (0, 0)),                # gamma_in
        pl.BlockSpec((Cout, 1), lambda n: (0, 0)),                # beta_in
        pl.BlockSpec((Cout, 1), lambda n: (0, 0)),                # gamma1
        pl.BlockSpec((Cout, 1), lambda n: (0, 0)),                # beta1
    ]
    args = [xr, w_in, w1, mask, gamma_in, beta_in, gamma1, beta1]
    if add_bias:
        in_specs.append(pl.BlockSpec((Cout, 1), lambda n: (0, 0)))
        args.append(b_in)
    if has_state:
        in_specs.append(pl.BlockSpec((None, Cout, HW), lambda n: (n, 0, 0)))
        args.append(state.reshape(N, Cout, HW))

    out = pl.pallas_call(
        kernel,
        out_shape=jax.ShapeDtypeStruct((N, Cout, HW), jnp.float32),
        grid=(N,),
        in_specs=in_specs,
        out_specs=pl.BlockSpec((None, Cout, HW), lambda n: (n, 0, 0)),
        scratch_shapes=[pltpu.VMEM((K1, HW), jnp.bfloat16),       # im2col, stage 1
                        pltpu.VMEM((K2, HW), jnp.bfloat16)],      # im2col, stage 2
        compiler_params=pltpu.CompilerParams(
            dimension_semantics=("parallel",),
            vmem_limit_bytes=_VMEM_LIMIT),
    )(*args)
    return out.reshape(N, Cout, H, W)


@functools.partial(jax.jit, static_argnames=("groups", "eps"))
def _conv_gn_relu_block(skip, w1, mask, gamma1, beta1, *, groups, eps):
    N, C, H, W = skip.shape
    Cout = gamma1.shape[0]
    HW = H * W
    K = 9 * C
    kernel = functools.partial(_conv_gn_relu_kernel, H=H, W=W, C=C,
                               groups=groups, eps=eps)
    out = pl.pallas_call(
        kernel,
        out_shape=jax.ShapeDtypeStruct((N, Cout, HW), jnp.float32),
        grid=(N,),
        in_specs=[
            pl.BlockSpec((None, C, HW), lambda n: (n, 0, 0)),
            pl.BlockSpec((Cout, K), lambda n: (0, 0)),
            pl.BlockSpec((9, HW), lambda n: (0, 0)),
            pl.BlockSpec((Cout, 1), lambda n: (0, 0)),
            pl.BlockSpec((Cout, 1), lambda n: (0, 0)),
        ],
        out_specs=pl.BlockSpec((None, Cout, HW), lambda n: (n, 0, 0)),
        scratch_shapes=[pltpu.VMEM((K, HW), jnp.bfloat16)],
        compiler_params=pltpu.CompilerParams(
            dimension_semantics=("parallel",),
            vmem_limit_bytes=_VMEM_LIMIT),
    )(skip.reshape(N, C, HW), w1, mask, gamma1, beta1)
    return out.reshape(N, Cout, H, W)


# ----------------------------------------------------------------------------
# One-time parameter packing (hoisted out of the per-call path)
# ----------------------------------------------------------------------------
def pack_corblock_params(params, *, spatial, num_groups=32, eps=1e-5):
    kh, kw, Cin, Cout = params["w_in"].shape
    assert (kh, kw) == (3, 3)
    assert params["w1"].shape == (3, 3, Cout, Cout)
    assert Cout % num_groups == 0
    H = W = spatial
    HW = H * W
    Cin_pad = ((Cin + 15) // 16) * 16     # bf16 sublane-tile aligned tap blocks

    def pack_w(w_hwio, cpad):
        _, _, ci, co = w_hwio.shape
        wp = jnp.zeros((3, 3, cpad, co), jnp.float32).at[:, :, :ci, :].set(w_hwio)
        return wp.reshape(9 * cpad, co).T.astype(jnp.bfloat16)    # (Cout, 9*cpad)

    rows = jnp.arange(HW, dtype=jnp.int32) // W
    cols = jnp.arange(HW, dtype=jnp.int32) % W
    taps = []
    for dy in range(3):
        for dx in range(3):
            ok = jnp.ones((HW,), jnp.bool_)
            if dy == 0:
                ok &= rows >= 1
            if dy == 2:
                ok &= rows <= H - 2
            if dx == 0:
                ok &= cols >= 1
            if dx == 2:
                ok &= cols <= W - 2
            taps.append(ok)
    mask = jnp.stack(taps, axis=0).astype(jnp.float32)            # (9, HW)

    col = lambda v: v.reshape(-1, 1).astype(jnp.float32)
    return {
        "w_in": pack_w(params["w_in"], Cin_pad),
        "w1": pack_w(params["w1"], Cout),
        "mask": mask,
        "b_in": col(params["b_in"]),
        "gamma_in": col(params["gamma_in"]), "beta_in": col(params["beta_in"]),
        "gamma1": col(params["gamma1"]), "beta1": col(params["beta1"]),
        "meta": dict(Cin=Cin, Cin_pad=Cin_pad, Cout=Cout, H=H, W=W,
                     groups=num_groups, eps=eps),
    }


# ----------------------------------------------------------------------------
# CORblock_RT forward (matches the PyTorch module's forward semantics)
# ----------------------------------------------------------------------------
def corblock_rt_forward(packed, inp=None, state=None, batch_size=None):
    m = packed["meta"]
    H, W, Cout = m["H"], m["W"], m["Cout"]
    has_state = not (state is None or (isinstance(state, (int, float)) and state == 0))

    if inp is None:
        # inp = zeros; skip = zeros + state; only conv1 + GN + ReLU runs.
        if has_state:
            skip = state
        else:
            assert batch_size is not None
            skip = jnp.zeros((batch_size, Cout, H, W), jnp.float32)
        out = _conv_gn_relu_block(skip, packed["w1"], packed["mask"],
                                  packed["gamma1"], packed["beta1"],
                                  groups=m["groups"], eps=m["eps"])
    else:
        assert inp.shape[1:] == (m["Cin"], H, W)
        out = _fused_block(inp, state if has_state else None,
                           packed["w_in"], packed["w1"], packed["mask"],
                           packed["b_in"], packed["gamma_in"], packed["beta_in"],
                           packed["gamma1"], packed["beta1"],
                           groups=m["groups"], eps=m["eps"], cin_pad=m["Cin_pad"],
                           has_state=has_state,
                           add_bias=(Cout // m["groups"] > 1))
    return out, out                      # (output, state) are the same tensor


# ----------------------------------------------------------------------------
# Pure-JAX f32 reference (for correctness checks only)
# ----------------------------------------------------------------------------
def _ref_forward(params, inp=None, state=None, batch_size=None, out_shape=None,
                 num_groups=32, eps=1e-5):
    Cout = params["w1"].shape[-1]

    def conv(x, w_hwio, b=None):
        w_oihw = jnp.transpose(w_hwio, (3, 2, 0, 1))
        y = jax.lax.conv_general_dilated(
            x, w_oihw, (1, 1), "SAME", dimension_numbers=("NCHW", "OIHW", "NCHW"))
        return y if b is None else y + b[None, :, None, None]

    def gn(x, g, b):
        N, C, H, W = x.shape
        xg = x.reshape(N, num_groups, C // num_groups, H * W)
        mu = xg.mean(axis=(2, 3), keepdims=True)
        va = xg.var(axis=(2, 3), keepdims=True)
        xn = ((xg - mu) / jnp.sqrt(va + eps)).reshape(N, C, H, W)
        return xn * g[None, :, None, None] + b[None, :, None, None]

    if inp is None:
        h = jnp.zeros((batch_size, Cout, out_shape, out_shape), jnp.float32)
    else:
        h = jax.nn.relu(gn(conv(inp, params["w_in"], params["b_in"]),
                           params["gamma_in"], params["beta_in"]))
    skip = h if (state is None or isinstance(state, (int, float))) else h + state
    x = jax.nn.relu(gn(conv(skip, params["w1"]), params["gamma1"], params["beta1"]))
    return x, x


if __name__ == "__main__":
    in_channels, out_channels = 4, 32    # out_channels must be divisible by 32 (GroupNorm)
    N, S = 2, 16

    key = jax.random.PRNGKey(0)
    k1, k2, k3, kx = jax.random.split(key, 4)
    params = {
        # conv_input: Conv2d(in, out, 3, stride=1, padding=1), HWIO weights
        "w_in": jax.random.normal(k1, (3, 3, in_channels, out_channels), jnp.float32) * 0.1,
        "b_in": jax.random.normal(k2, (out_channels,), jnp.float32) * 0.1,
        # norm_input: GroupNorm(32, out) default affine init
        "gamma_in": jnp.ones((out_channels,), jnp.float32),
        "beta_in": jnp.zeros((out_channels,), jnp.float32),
        # conv1: Conv2d(out, out, 3, padding=1, bias=False)
        "w1": jax.random.normal(k3, (3, 3, out_channels, out_channels), jnp.float32) * 0.05,
        "gamma1": jnp.ones((out_channels,), jnp.float32),
        "beta1": jnp.zeros((out_channels,), jnp.float32),
    }
    packed = pack_corblock_params(params, spatial=S)               # one-time repack

    x = jax.random.normal(kx, (N, in_channels, S, S), jnp.float32)  # NCHW input

    # t = 0 : input, no recurrent state
    out1, st1 = corblock_rt_forward(packed, inp=x, state=None)
    out1 = jax.block_until_ready(out1)
    assert out1.shape == (N, out_channels, S, S)
    ref1, _ = _ref_forward(params, inp=x, state=None)
    e1 = float(jnp.max(jnp.abs(out1 - ref1)))
    assert bool(jnp.allclose(out1, ref1, rtol=2e-2, atol=2e-2)), f"t0 mismatch {e1:.3e}"

    # t = 1 : input + recurrent state (exercises the fused in-VMEM skip add)
    out2, st2 = corblock_rt_forward(packed, inp=x, state=st1)
    out2 = jax.block_until_ready(out2)
    ref2, _ = _ref_forward(params, inp=x, state=st1)
    e2 = float(jnp.max(jnp.abs(out2 - ref2)))
    assert bool(jnp.allclose(out2, ref2, rtol=2e-2, atol=2e-2)), f"t1 mismatch {e2:.3e}"

    # inp=None branch: block driven only by its recurrent state
    out3, st3 = corblock_rt_forward(packed, inp=None, state=st2, batch_size=N)
    out3 = jax.block_until_ready(out3)
    ref3, _ = _ref_forward(params, inp=None, state=st2, batch_size=N, out_shape=S)
    e3 = float(jnp.max(jnp.abs(out3 - ref3)))
    assert bool(jnp.allclose(out3, ref3, rtol=2e-2, atol=2e-2)), f"no-inp mismatch {e3:.3e}"

    print("KERNEL_OK")
</pallas_src>

<mosaic_0001>
module attributes {stable_mosaic.version = 11 : i64} {
  func.func @_fused_kernel(%arg0: i32, %arg1: memref<1x16x256xf32, #tpu.memory_space<vmem>>, %arg2: memref<32x144xbf16, #tpu.memory_space<vmem>>, %arg3: memref<32x288xbf16, #tpu.memory_space<vmem>>, %arg4: memref<9x256xf32, #tpu.memory_space<vmem>>, %arg5: memref<32x1xf32, #tpu.memory_space<vmem>>, %arg6: memref<32x1xf32, #tpu.memory_space<vmem>>, %arg7: memref<32x1xf32, #tpu.memory_space<vmem>>, %arg8: memref<32x1xf32, #tpu.memory_space<vmem>>, %arg9: memref<1x32x256xf32, #tpu.memory_space<vmem>>, %arg10: memref<144x256xbf16, #tpu.memory_space<vmem>>, %arg11: memref<288x256xbf16, #tpu.memory_space<vmem>>) attributes {dimension_semantics = [#tpu.dimension_semantics<parallel>], iteration_bounds = array<i64: 2>, scalar_prefetch = 0 : i64, scratch_operands = 2 : i64, tpu.core_type = #tpu.core_type<tc>, window_params = [{transform_indices = @transform_0, window_bounds = array<i64: 1, 16, 256>}, {pipeline_mode = #tpu.pipeline_mode<synchronous>, transform_indices = @transform_1, window_bounds = array<i64: 32, 144>}, {pipeline_mode = #tpu.pipeline_mode<synchronous>, transform_indices = @transform_2, window_bounds = array<i64: 32, 288>}, {pipeline_mode = #tpu.pipeline_mode<synchronous>, transform_indices = @transform_3, window_bounds = array<i64: 9, 256>}, {pipeline_mode = #tpu.pipeline_mode<synchronous>, transform_indices = @transform_4, window_bounds = array<i64: 32, 1>}, {pipeline_mode = #tpu.pipeline_mode<synchronous>, transform_indices = @transform_5, window_bounds = array<i64: 32, 1>}, {pipeline_mode = #tpu.pipeline_mode<synchronous>, transform_indices = @transform_6, window_bounds = array<i64: 32, 1>}, {pipeline_mode = #tpu.pipeline_mode<synchronous>, transform_indices = @transform_7, window_bounds = array<i64: 32, 1>}, {transform_indices = @transform_8, window_bounds = array<i64: 1, 32, 256>}]} {
    %c0 = arith.constant 0 : index
    %c0_0 = arith.constant 0 : index
    %c0_1 = arith.constant 0 : index
    %0 = vector.load %arg1[%c0, %c0_0, %c0_1] : memref<1x16x256xf32, #tpu.memory_space<vmem>>, vector<1x16x256xf32>
    %1 = vector.shape_cast %0 : vector<1x16x256xf32> to vector<16x256xf32>
    %c17_i32 = arith.constant 17 : i32
    %2 = tpu.dynamic_rotate %1 by %c17_i32 dim 1 : vector<16x256xf32>, i32 -> vector<16x256xf32>
    %c0_2 = arith.constant 0 : index
    %c0_3 = arith.constant 0 : index
    %3 = vector.load %arg4[%c0_2, %c0_3] : memref<9x256xf32, #tpu.memory_space<vmem>>, vector<1x256xf32>
    %4 = vector.broadcast %3 : vector<1x256xf32> to vector<16x256xf32>
    %5 = arith.mulf %2, %4 : vector<16x256xf32>
    %6 = arith.truncf %5 : vector<16x256xf32> to vector<16x256xbf16>
    %c0_4 = arith.constant 0 : index
    %c0_5 = arith.constant 0 : index
    %7 = vector.load %arg10[%c0_4, %c0_5] : memref<144x256xbf16, #tpu.memory_space<vmem>>, vector<16x256xbf16>
    tpu.vector_store %arg10[%c0_4, %c0_5], %6 {strides = array<i32>} : memref<144x256xbf16, #tpu.memory_space<vmem>>, vector<16x256xbf16>,
    %c16_i32 = arith.constant 16 : i32
    %8 = tpu.dynamic_rotate %1 by %c16_i32 dim 1 : vector<16x256xf32>, i32 -> vector<16x256xf32>
    %c1 = arith.constant 1 : index
    %c0_6 = arith.constant 0 : index
    %9 = vector.load %arg4[%c1, %c0_6] : memref<9x256xf32, #tpu.memory_space<vmem>>, vector<1x256xf32>
    %10 = vector.broadcast %9 : vector<1x256xf32> to vector<16x256xf32>
    %11 = arith.mulf %8, %10 : vector<16x256xf32>
    %12 = arith.truncf %11 : vector<16x256xf32> to vector<16x256xbf16>
    %c16 = arith.constant 16 : index
    %c0_7 = arith.constant 0 : index
    %13 = vector.load %arg10[%c16, %c0_7] : memref<144x256xbf16, #tpu.memory_space<vmem>>, vector<16x256xbf16>
    tpu.vector_store %arg10[%c16, %c0_7], %12 {strides = array<i32>} : memref<144x256xbf16, #tpu.memory_space<vmem>>, vector<16x256xbf16>,
    %c15_i32 = arith.constant 15 : i32
    %14 = tpu.dynamic_rotate %1 by %c15_i32 dim 1 : vector<16x256xf32>, i32 -> vector<16x256xf32>
    %c2 = arith.constant 2 : index
    %c0_8 = arith.constant 0 : index
    %15 = vector.load %arg4[%c2, %c0_8] : memref<9x256xf32, #tpu.memory_space<vmem>>, vector<1x256xf32>
    %16 = vector.broadcast %15 : vector<1x256xf32> to vector<16x256xf32>
    %17 = arith.mulf %14, %16 : vector<16x256xf32>
    %18 = arith.truncf %17 : vector<16x256xf32> to vector<16x256xbf16>
    %c32 = arith.constant 32 : index
    %c0_9 = arith.constant 0 : index
    %19 = vector.load %arg10[%c32, %c0_9] : memref<144x256xbf16, #tpu.memory_space<vmem>>, vector<16x256xbf16>
    tpu.vector_store %arg10[%c32, %c0_9], %18 {strides = array<i32>} : memref<144x256xbf16, #tpu.memory_space<vmem>>, vector<16x256xbf16>,
    %c1_i32 = arith.constant 1 : i32
    %20 = tpu.dynamic_rotate %1 by %c1_i32 dim 1 : vector<16x256xf32>, i32 -> vector<16x256xf32>
    %c3 = arith.constant 3 : index
    %c0_10 = arith.constant 0 : index
    %21 = vector.load %arg4[%c3, %c0_10] : memref<9x256xf32, #tpu.memory_space<vmem>>, vector<1x256xf32>
    %22 = vector.broadcast %21 : vector<1x256xf32> to vector<16x256xf32>
    %23 = arith.mulf %20, %22 : vector<16x256xf32>
    %24 = arith.truncf %23 : vector<16x256xf32> to vector<16x256xbf16>
    %c48 = arith.constant 48 : index
    %c0_11 = arith.constant 0 : index
    %25 = vector.load %arg10[%c48, %c0_11] : memref<144x256xbf16, #tpu.memory_space<vmem>>, vector<16x256xbf16>
    tpu.vector_store %arg10[%c48, %c0_11], %24 {strides = array<i32>} : memref<144x256xbf16, #tpu.memory_space<vmem>>, vector<16x256xbf16>,
    %26 = arith.truncf %1 : vector<16x256xf32> to vector<16x256xbf16>
    %c64 = arith.constant 64 : index
    %c0_12 = arith.constant 0 : index
    %27 = vector.load %arg10[%c64, %c0_12] : memref<144x256xbf16, #tpu.memory_space<vmem>>, vector<16x256xbf16>
    tpu.vector_store %arg10[%c64, %c0_12], %26 {strides = array<i32>} : memref<144x256xbf16, #tpu.memory_space<vmem>>, vector<16x256xbf16>,
    %c255_i32 = arith.constant 255 : i32
    %28 = tpu.dynamic_rotate %1 by %c255_i32 dim 1 : vector<16x256xf32>, i32 -> vector<16x256xf32>
    %c5 = arith.constant 5 : index
    %c0_13 = arith.constant 0 : index
    %29 = vector.load %arg4[%c5, %c0_13] : memref<9x256xf32, #tpu.memory_space<vmem>>, vector<1x256xf32>
    %30 = vector.broadcast %29 : vector<1x256xf32> to vector<16x256xf32>
    %31 = arith.mulf %28, %30 : vector<16x256xf32>
    %32 = arith.truncf %31 : vector<16x256xf32> to vector<16x256xbf16>
    %c80 = arith.constant 80 : index
    %c0_14 = arith.constant 0 : index
    %33 = vector.load %arg10[%c80, %c0_14] : memref<144x256xbf16, #tpu.memory_space<vmem>>, vector<16x256xbf16>
    tpu.vector_store %arg10[%c80, %c0_14], %32 {strides = array<i32>} : memref<144x256xbf16, #tpu.memory_space<vmem>>, vector<16x256xbf16>,
    %c241_i32 = arith.constant 241 : i32
    %34 = tpu.dynamic_rotate %1 by %c241_i32 dim 1 : vector<16x256xf32>, i32 -> vector<16x256xf32>
    %c6 = arith.constant 6 : index
    %c0_15 = arith.constant 0 : index
    %35 = vector.load %arg4[%c6, %c0_15] : memref<9x256xf32, #tpu.memory_space<vmem>>, vector<1x256xf32>
    %36 = vector.broadcast %35 : vector<1x256xf32> to vector<16x256xf32>
    %37 = arith.mulf %34, %36 : vector<16x256xf32>
    %38 = arith.truncf %37 : vector<16x256xf32> to vector<16x256xbf16>
    %c96 = arith.constant 96 : index
    %c0_16 = arith.constant 0 : index
    %39 = vector.load %arg10[%c96, %c0_16] : memref<144x256xbf16, #tpu.memory_space<vmem>>, vector<16x256xbf16>
    tpu.vector_store %arg10[%c96, %c0_16], %38 {strides = array<i32>} : memref<144x256xbf16, #tpu.memory_space<vmem>>, vector<16x256xbf16>,
    %c240_i32 = arith.constant 240 : i32
    %40 = tpu.dynamic_rotate %1 by %c240_i32 dim 1 : vector<16x256xf32>, i32 -> vector<16x256xf32>
    %c7 = arith.constant 7 : index
    %c0_17 = arith.constant 0 : index
    %41 = vector.load %arg4[%c7, %c0_17] : memref<9x256xf32, #tpu.memory_space<vmem>>, vector<1x256xf32>
    %42 = vector.broadcast %41 : vector<1x256xf32> to vector<16x256xf32>
    %43 = arith.mulf %40, %42 : vector<16x256xf32>
    %44 = arith.truncf %43 : vector<16x256xf32> to vector<16x256xbf16>
    %c112 = arith.constant 112 : index
    %c0_18 = arith.constant 0 : index
    %45 = vector.load %arg10[%c112, %c0_18] : memref<144x256xbf16, #tpu.memory_space<vmem>>, vector<16x256xbf16>
    tpu.vector_store %arg10[%c112, %c0_18], %44 {strides = array<i32>} : memref<144x256xbf16, #tpu.memory_space<vmem>>, vector<16x256xbf16>,
    %c239_i32 = arith.constant 239 : i32
    %46 = tpu.dynamic_rotate %1 by %c239_i32 dim 1 : vector<16x256xf32>, i32 -> vector<16x256xf32>
    %c8 = arith.constant 8 : index
    %c0_19 = arith.constant 0 : index
    %47 = vector.load %arg4[%c8, %c0_19] : memref<9x256xf32, #tpu.memory_space<vmem>>, vector<1x256xf32>
    %48 = vector.broadcast %47 : vector<1x256xf32> to vector<16x256xf32>
    %49 = arith.mulf %46, %48 : vector<16x256xf32>
    %50 = arith.truncf %49 : vector<16x256xf32> to vector<16x256xbf16>
    %c128 = arith.constant 128 : index
    %c0_20 = arith.constant 0 : index
    %51 = vector.load %arg10[%c128, %c0_20] : memref<144x256xbf16, #tpu.memory_space<vmem>>, vector<16x256xbf16>
    tpu.vector_store %arg10[%c128, %c0_20], %50 {strides = array<i32>} : memref<144x256xbf16, #tpu.memory_space<vmem>>, vector<16x256xbf16>,
    %c0_21 = arith.constant 0 : index
    %c0_22 = arith.constant 0 : index
    %52 = vector.load %arg2[%c0_21, %c0_22] : memref<32x144xbf16, #tpu.memory_space<vmem>>, vector<32x144xbf16>
    %c0_23 = arith.constant 0 : index
    %c0_24 = arith.constant 0 : index
    %53 = vector.load %arg10[%c0_23, %c0_24] : memref<144x256xbf16, #tpu.memory_space<vmem>>, vector<144x256xbf16>
    %cst = arith.constant dense<0.000000e+00> : vector<32x256xf32>
    %54 = tpu.matmul %52, %53, %cst {dimension_numbers = #tpu.dot_dimension_numbers<[1], [0], [0], [1], [0, 0, 1, 1], [], []>} : vector<32x144xbf16>, vector<144x256xbf16>, vector<32x256xf32> -> vector<32x256xf32>
    %c0_25 = arith.constant 0 : index
    %c0_26 = arith.constant 0 : index
    %55 = vector.load %arg5[%c0_25, %c0_26] : memref<32x1xf32, #tpu.memory_space<vmem>>, vector<32x1xf32>
    %c0_27 = arith.constant 0 : index
    %c0_28 = arith.constant 0 : index
    %56 = vector.load %arg6[%c0_27, %c0_28] : memref<32x1xf32, #tpu.memory_space<vmem>>, vector<32x1xf32>
    %cst_29 = arith.constant dense<0.000000e+00> : vector<32xf32>
    %57 = vector.multi_reduction <add>, %54, %cst_29 [1] : vector<32x256xf32> to vector<32xf32>
    %58 = vector.shape_cast %57 : vector<32xf32> to vector<32x1xf32>
    %cst_30 = arith.constant 3.906250e-03 : f32
    %59 = vector.broadcast %cst_30 : f32 to vector<32x1xf32>
    %60 = arith.mulf %58, %59 : vector<32x1xf32>
    %61 = vector.broadcast %60 : vector<32x1xf32> to vector<32x256xf32>
    %62 = arith.subf %54, %61 : vector<32x256xf32>
    %63 = arith.mulf %62, %62 : vector<32x256xf32>
    %cst_31 = arith.constant dense<0.000000e+00> : vector<32xf32>
    %64 = vector.multi_reduction <add>, %63, %cst_31 [1] : vector<32x256xf32> to vector<32xf32>
    %65 = vector.shape_cast %64 : vector<32xf32> to vector<32x1xf32>
    %cst_32 = arith.constant 3.906250e-03 : f32
    %66 = vector.broadcast %cst_32 : f32 to vector<32x1xf32>
    %67 = arith.mulf %65, %66 : vector<32x1xf32>
    %cst_33 = arith.constant 9.99999974E-6 : f32
    %68 = vector.broadcast %cst_33 : f32 to vector<32x1xf32>
    %69 = arith.addf %67, %68 : vector<32x1xf32>
    %70 = math.rsqrt %69 : vector<32x1xf32>
    %71 = arith.mulf %70, %55 : vector<32x1xf32>
    %72 = vector.broadcast %71 : vector<32x1xf32> to vector<32x256xf32>
    %73 = arith.mulf %62, %72 : vector<32x256xf32>
    %74 = vector.broadcast %56 : vector<32x1xf32> to vector<32x256xf32>
    %75 = arith.addf %73, %74 : vector<32x256xf32>
    %cst_34 = arith.constant 0.000000e+00 : f32
    %76 = vector.broadcast %cst_34 : f32 to vector<32x256xf32>
    %77 = arith.maximumf %75, %76 : vector<32x256xf32>
    %c17_i32_35 = arith.constant 17 : i32
    %78 = tpu.dynamic_rotate %77 by %c17_i32_35 dim 1 : vector<32x256xf32>, i32 -> vector<32x256xf32>
    %c0_36 = arith.constant 0 : index
    %c0_37 = arith.constant 0 : index
    %79 = vector.load %arg4[%c0_36, %c0_37] : memref<9x256xf32, #tpu.memory_space<vmem>>, vector<1x256xf32>
    %80 = vector.broadcast %79 : vector<1x256xf32> to vector<32x256xf32>
    %81 = arith.mulf %78, %80 : vector<32x256xf32>
    %82 = arith.truncf %81 : vector<32x256xf32> to vector<32x256xbf16>
    %c0_38 = arith.constant 0 : index
    %c0_39 = arith.constant 0 : index
    %83 = vector.load %arg11[%c0_38, %c0_39] : memref<288x256xbf16, #tpu.memory_space<vmem>>, vector<32x256xbf16>
    tpu.vector_store %arg11[%c0_38, %c0_39], %82 {strides = array<i32>} : memref<288x256xbf16, #tpu.memory_space<vmem>>, vector<32x256xbf16>,
    %c16_i32_40 = arith.constant 16 : i32
    %84 = tpu.dynamic_rotate %77 by %c16_i32_40 dim 1 : vector<32x256xf32>, i32 -> vector<32x256xf32>
    %c1_41 = arith.constant 1 : index
    %c0_42 = arith.constant 0 : index
    %85 = vector.load %arg4[%c1_41, %c0_42] : memref<9x256xf32, #tpu.memory_space<vmem>>, vector<1x256xf32>
    %86 = vector.broadcast %85 : vector<1x256xf32> to vector<32x256xf32>
    %87 = arith.mulf %84, %86 : vector<32x256xf32>
    %88 = arith.truncf %87 : vector<32x256xf32> to vector<32x256xbf16>
    %c32_43 = arith.constant 32 : index
    %c0_44 = arith.constant 0 : index
    %89 = vector.load %arg11[%c32_43, %c0_44] : memref<288x256xbf16, #tpu.memory_space<vmem>>, vector<32x256xbf16>
    tpu.vector_store %arg11[%c32_43, %c0_44], %88 {strides = array<i32>} : memref<288x256xbf16, #tpu.memory_space<vmem>>, vector<32x256xbf16>,
    %c15_i32_45 = arith.constant 15 : i32
    %90 = tpu.dynamic_rotate %77 by %c15_i32_45 dim 1 : vector<32x256xf32>, i32 -> vector<32x256xf32>
    %c2_46 = arith.constant 2 : index
    %c0_47 = arith.constant 0 : index
    %91 = vector.load %arg4[%c2_46, %c0_47] : memref<9x256xf32, #tpu.memory_space<vmem>>, vector<1x256xf32>
    %92 = vector.broadcast %91 : vector<1x256xf32> to vector<32x256xf32>
    %93 = arith.mulf %90, %92 : vector<32x256xf32>
    %94 = arith.truncf %93 : vector<32x256xf32> to vector<32x256xbf16>
    %c64_48 = arith.constant 64 : index
    %c0_49 = arith.constant 0 : index
    %95 = vector.load %arg11[%c64_48, %c0_49] : memref<288x256xbf16, #tpu.memory_space<vmem>>, vector<32x256xbf16>
    tpu.vector_store %arg11[%c64_48, %c0_49], %94 {strides = array<i32>} : memref<288x256xbf16, #tpu.memory_space<vmem>>, vector<32x256xbf16>,
    %c1_i32_50 = arith.constant 1 : i32
    %96 = tpu.dynamic_rotate %77 by %c1_i32_50 dim 1 : vector<32x256xf32>, i32 -> vector<32x256xf32>
    %c3_51 = arith.constant 3 : index
    %c0_52 = arith.constant 0 : index
    %97 = vector.load %arg4[%c3_51, %c0_52] : memref<9x256xf32, #tpu.memory_space<vmem>>, vector<1x256xf32>
    %98 = vector.broadcast %97 : vector<1x256xf32> to vector<32x256xf32>
    %99 = arith.mulf %96, %98 : vector<32x256xf32>
    %100 = arith.truncf %99 : vector<32x256xf32> to vector<32x256xbf16>
    %c96_53 = arith.constant 96 : index
    %c0_54 = arith.constant 0 : index
    %101 = vector.load %arg11[%c96_53, %c0_54] : memref<288x256xbf16, #tpu.memory_space<vmem>>, vector<32x256xbf16>
    tpu.vector_store %arg11[%c96_53, %c0_54], %100 {strides = array<i32>} : memref<288x256xbf16, #tpu.memory_space<vmem>>, vector<32x256xbf16>,
    %102 = arith.truncf %77 : vector<32x256xf32> to vector<32x256xbf16>
    %c128_55 = arith.constant 128 : index
    %c0_56 = arith.constant 0 : index
    %103 = vector.load %arg11[%c128_55, %c0_56] : memref<288x256xbf16, #tpu.memory_space<vmem>>, vector<32x256xbf16>
    tpu.vector_store %arg11[%c128_55, %c0_56], %102 {strides = array<i32>} : memref<288x256xbf16, #tpu.memory_space<vmem>>, vector<32x256xbf16>,
    %c255_i32_57 = arith.constant 255 : i32
    %104 = tpu.dynamic_rotate %77 by %c255_i32_57 dim 1 : vector<32x256xf32>, i32 -> vector<32x256xf32>
    %c5_58 = arith.constant 5 : index
    %c0_59 = arith.constant 0 : index
    %105 = vector.load %arg4[%c5_58, %c0_59] : memref<9x256xf32, #tpu.memory_space<vmem>>, vector<1x256xf32>
    %106 = vector.broadcast %105 : vector<1x256xf32> to vector<32x256xf32>
    %107 = arith.mulf %104, %106 : vector<32x256xf32>
    %108 = arith.truncf %107 : vector<32x256xf32> to vector<32x256xbf16>
    %c160 = arith.constant 160 : index
    %c0_60 = arith.constant 0 : index
    %109 = vector.load %arg11[%c160, %c0_60] : memref<288x256xbf16, #tpu.memory_space<vmem>>, vector<32x256xbf16>
    tpu.vector_store %arg11[%c160, %c0_60], %108 {strides = array<i32>} : memref<288x256xbf16, #tpu.memory_space<vmem>>, vector<32x256xbf16>,
    %c241_i32_61 = arith.constant 241 : i32
    %110 = tpu.dynamic_rotate %77 by %c241_i32_61 dim 1 : vector<32x256xf32>, i32 -> vector<32x256xf32>
    %c6_62 = arith.constant 6 : index
    %c0_63 = arith.constant 0 : index
    %111 = vector.load %arg4[%c6_62, %c0_63] : memref<9x256xf32, #tpu.memory_space<vmem>>, vector<1x256xf32>
    %112 = vector.broadcast %111 : vector<1x256xf32> to vector<32x256xf32>
    %113 = arith.mulf %110, %112 : vector<32x256xf32>
    %114 = arith.truncf %113 : vector<32x256xf32> to vector<32x256xbf16>
    %c192 = arith.constant 192 : index
    %c0_64 = arith.constant 0 : index
    %115 = vector.load %arg11[%c192, %c0_64] : memref<288x256xbf16, #tpu.memory_space<vmem>>, vector<32x256xbf16>
    tpu.vector_store %arg11[%c192, %c0_64], %114 {strides = array<i32>} : memref<288x256xbf16, #tpu.memory_space<vmem>>, vector<32x256xbf16>,
    %c240_i32_65 = arith.constant 240 : i32
    %116 = tpu.dynamic_rotate %77 by %c240_i32_65 dim 1 : vector<32x256xf32>, i32 -> vector<32x256xf32>
    %c7_66 = arith.constant 7 : index
    %c0_67 = arith.constant 0 : index
    %117 = vector.load %arg4[%c7_66, %c0_67] : memref<9x256xf32, #tpu.memory_space<vmem>>, vector<1x256xf32>
    %118 = vector.broadcast %117 : vector<1x256xf32> to vector<32x256xf32>
    %119 = arith.mulf %116, %118 : vector<32x256xf32>
    %120 = arith.truncf %119 : vector<32x256xf32> to vector<32x256xbf16>
    %c224 = arith.constant 224 : index
    %c0_68 = arith.constant 0 : index
    %121 = vector.load %arg11[%c224, %c0_68] : memref<288x256xbf16, #tpu.memory_space<vmem>>, vector<32x256xbf16>
    tpu.vector_store %arg11[%c224, %c0_68], %120 {strides = array<i32>} : memref<288x256xbf16, #tpu.memory_space<vmem>>, vector<32x256xbf16>,
    %c239_i32_69 = arith.constant 239 : i32
    %122 = tpu.dynamic_rotate %77 by %c239_i32_69 dim 1 : vector<32x256xf32>, i32 -> vector<32x256xf32>
    %c8_70 = arith.constant 8 : index
    %c0_71 = arith.constant 0 : index
    %123 = vector.load %arg4[%c8_70, %c0_71] : memref<9x256xf32, #tpu.memory_space<vmem>>, vector<1x256xf32>
    %124 = vector.broadcast %123 : vector<1x256xf32> to vector<32x256xf32>
    %125 = arith.mulf %122, %124 : vector<32x256xf32>
    %126 = arith.truncf %125 : vector<32x256xf32> to vector<32x256xbf16>
    %c256 = arith.constant 256 : index
    %c0_72 = arith.constant 0 : index
    %127 = vector.load %arg11[%c256, %c0_72] : memref<288x256xbf16, #tpu.memory_space<vmem>>, vector<32x256xbf16>
    tpu.vector_store %arg11[%c256, %c0_72], %126 {strides = array<i32>} : memref<288x256xbf16, #tpu.memory_space<vmem>>, vector<32x256xbf16>,
    %c0_73 = arith.constant 0 : index
    %c0_74 = arith.constant 0 : index
    %128 = vector.load %arg3[%c0_73, %c0_74] : memref<32x288xbf16, #tpu.memory_space<vmem>>, vector<32x288xbf16>
    %c0_75 = arith.constant 0 : index
    %c0_76 = arith.constant 0 : index
    %129 = vector.load %arg11[%c0_75, %c0_76] : memref<288x256xbf16, #tpu.memory_space<vmem>>, vector<288x256xbf16>
    %cst_77 = arith.constant dense<0.000000e+00> : vector<32x256xf32>
    %130 = tpu.matmul %128, %129, %cst_77 {dimension_numbers = #tpu.dot_dimension_numbers<[1], [0], [0], [1], [0, 0, 1, 1], [], []>} : vector<32x288xbf16>, vector<288x256xbf16>, vector<32x256xf32> -> vector<32x256xf32>
    %c0_78 = arith.constant 0 : index
    %c0_79 = arith.constant 0 : index
    %131 = vector.load %arg7[%c0_78, %c0_79] : memref<32x1xf32, #tpu.memory_space<vmem>>, vector<32x1xf32>
    %c0_80 = arith.constant 0 : index
    %c0_81 = arith.constant 0 : index
    %132 = vector.load %arg8[%c0_80, %c0_81] : memref<32x1xf32, #tpu.memory_space<vmem>>, vector<32x1xf32>
    %cst_82 = arith.constant dense<0.000000e+00> : vector<32xf32>
    %133 = vector.multi_reduction <add>, %130, %cst_82 [1] : vector<32x256xf32> to vector<32xf32>
    %134 = vector.shape_cast %133 : vector<32xf32> to vector<32x1xf32>
    %cst_83 = arith.constant 3.906250e-03 : f32
    %135 = vector.broadcast %cst_83 : f32 to vector<32x1xf32>
    %136 = arith.mulf %134, %135 : vector<32x1xf32>
    %137 = vector.broadcast %136 : vector<32x1xf32> to vector<32x256xf32>
    %138 = arith.subf %130, %137 : vector<32x256xf32>
    %139 = arith.mulf %138, %138 : vector<32x256xf32>
    %cst_84 = arith.constant dense<0.000000e+00> : vector<32xf32>
    %140 = vector.multi_reduction <add>, %139, %cst_84 [1] : vector<32x256xf32> to vector<32xf32>
    %141 = vector.shape_cast %140 : vector<32xf32> to vector<32x1xf32>
    %cst_85 = arith.constant 3.906250e-03 : f32
    %142 = vector.broadcast %cst_85 : f32 to vector<32x1xf32>
    %143 = arith.mulf %141, %142 : vector<32x1xf32>
    %cst_86 = arith.constant 9.99999974E-6 : f32
    %144 = vector.broadcast %cst_86 : f32 to vector<32x1xf32>
    %145 = arith.addf %143, %144 : vector<32x1xf32>
    %146 = math.rsqrt %145 : vector<32x1xf32>
    %147 = arith.mulf %146, %131 : vector<32x1xf32>
    %148 = vector.broadcast %147 : vector<32x1xf32> to vector<32x256xf32>
    %149 = arith.mulf %138, %148 : vector<32x256xf32>
    %150 = vector.broadcast %132 : vector<32x1xf32> to vector<32x256xf32>
    %151 = arith.addf %149, %150 : vector<32x256xf32>
    %cst_87 = arith.constant 0.000000e+00 : f32
    %152 = vector.broadcast %cst_87 : f32 to vector<32x256xf32>
    %153 = arith.maximumf %151, %152 : vector<32x256xf32>
    %c0_88 = arith.constant 0 : index
    %c0_89 = arith.constant 0 : index
    %c0_90 = arith.constant 0 : index
    %154 = vector.load %arg9[%c0_88, %c0_89, %c0_90] : memref<1x32x256xf32, #tpu.memory_space<vmem>>, vector<1x32x256xf32>
    %155 = vector.shape_cast %154 : vector<1x32x256xf32> to vector<32x256xf32>
    %156 = vector.shape_cast %153 : vector<32x256xf32> to vector<1x32x256xf32>
    tpu.vector_store %arg9[%c0_88, %c0_89, %c0_90], %156 {strides = array<i32>} : memref<1x32x256xf32, #tpu.memory_space<vmem>>, vector<1x32x256xf32>,
    return
  }
  func.func @transform_0(%arg0: i32) -> (i32, i32, i32) {
    %c0_i32 = arith.constant 0 : i32
    %c0_i32_0 = arith.constant 0 : i32
    %c0_i32_1 = arith.constant 0 : i32
    return %arg0, %c0_i32, %c0_i32_0 : i32, i32, i32
  }
  func.func @transform_1(%arg0: i32) -> (i32, i32) {
    %c0_i32 = arith.constant 0 : i32
    %c0_i32_0 = arith.constant 0 : i32
    %c0_i32_1 = arith.constant 0 : i32
    return %c0_i32, %c0_i32_0 : i32, i32
  }
  func.func @transform_2(%arg0: i32) -> (i32, i32) {
    %c0_i32 = arith.constant 0 : i32
    %c0_i32_0 = arith.constant 0 : i32
    %c0_i32_1 = arith.constant 0 : i32
    return %c0_i32, %c0_i32_0 : i32, i32
  }
  func.func @transform_3(%arg0: i32) -> (i32, i32) {
    %c0_i32 = arith.constant 0 : i32
    %c0_i32_0 = arith.constant 0 : i32
    %c0_i32_1 = arith.constant 0 : i32
    return %c0_i32, %c0_i32_0 : i32, i32
  }
  func.func @transform_4(%arg0: i32) -> (i32, i32) {
    %c0_i32 = arith.constant 0 : i32
    %c0_i32_0 = arith.constant 0 : i32
    %c0_i32_1 = arith.constant 0 : i32
    return %c0_i32, %c0_i32_0 : i32, i32
  }
  func.func @transform_5(%arg0: i32) -> (i32, i32) {
    %c0_i32 = arith.constant 0 : i32
    %c0_i32_0 = arith.constant 0 : i32
    %c0_i32_1 = arith.constant 0 : i32
    return %c0_i32, %c0_i32_0 : i32, i32
  }
  func.func @transform_6(%arg0: i32) -> (i32, i32) {
    %c0_i32 = arith.constant 0 : i32
    %c0_i32_0 = arith.constant 0 : i32
    %c0_i32_1 = arith.constant 0 : i32
    return %c0_i32, %c0_i32_0 : i32, i32
  }
  func.func @transform_7(%arg0: i32) -> (i32, i32) {
    %c0_i32 = arith.constant 0 : i32
    %c0_i32_0 = arith.constant 0 : i32
    %c0_i32_1 = arith.constant 0 : i32
    return %c0_i32, %c0_i32_0 : i32, i32
  }
  func.func @transform_8(%arg0: i32) -> (i32, i32, i32) {
    %c0_i32 = arith.constant 0 : i32
    %c0_i32_0 = arith.constant 0 : i32
    %c0_i32_1 = arith.constant 0 : i32
    return %arg0, %c0_i32, %c0_i32_0 : i32, i32, i32
  }
}

</mosaic_0001>

<llo_original>
// kernel: _fused_block.1
$region0: #{_fused_block.1}
  #allocation0 [shape = 'u32[]', space=smem, size = 0x4, offset = 0x4, fixed_abs, tag = 'smem constant byte address 0x4 - core index']
  #allocation1 [shape = 'u32[144,128]{1,0:T(1,128)}', space=vmem, size = 0x12000, scoped, tag = 'internal scratch']
  #allocation2 [shape = 'bf16[144,256]{1,0:T(8,128)(2,1)}', space=vmem, size = 0x12000, scoped, tag = 'scratch operand']
  #allocation3 [shape = 'bf16[288,256]{1,0:T(8,128)(2,1)}', space=vmem, size = 0x24000, scoped, tag = 'scratch operand']
  %s0 = inlined_call_operand.vmem [shape: f32[2,16,256], index: 0, kind: input, shape index: {}]
  %s1 = inlined_call_operand.vmem [shape: bf16[32,144], index: 1, kind: input, shape index: {}]
  %s2 = inlined_call_operand.vmem [shape: bf16[32,288], index: 2, kind: input, shape index: {}]
  %s3 = inlined_call_operand.vmem [shape: f32[9,256], index: 3, kind: input, shape index: {}]
  %s4 = inlined_call_operand.vmem [shape: f32[32,1], index: 4, kind: input, shape index: {}]
  %s5 = inlined_call_operand.vmem [shape: f32[32,1], index: 5, kind: input, shape index: {}]
  %s6 = inlined_call_operand.vmem [shape: f32[32,1], index: 6, kind: input, shape index: {}]
  %s7 = inlined_call_operand.vmem [shape: f32[32,1], index: 7, kind: input, shape index: {}]
  %s8 = inlined_call_operand.vmem [shape: f32[2,32,256], index: 8, kind: output, shape index: {}]
  %s9 = sld [smem:[#allocation0]]
  $region65: #{_fused_block.1} parent=0
    _
  %s11 = ssub.s32 1, %s9
  %s12 = scalar_select 0, %s11, %s9
  loop: start=0, step=1, limit=4
  $region2: #{_fused_block.1} parent=0 // loop_pre_header
    _
  $region3: #{_fused_block.1} parent=0 // loop_header
    %s14 = sphi 0, %s18
    %p15 = scmp.ge.s32.totalorder %s14, 4
    %s24 = sphi 0, %s26
    %s27 = sphi 0, %s24
    %s28 = sphi 0, %s27
    %s44 = sphi 0, %s28
    %s48 = sphi 0, %s48
    %s50 = sphi 0, %s48
    %s51 = sphi 0, %s50
    %s65 = sphi 0, %s51
    %s69 = sphi 0, %s69
    %s71 = sphi 0, %s69
    %s72 = sphi 0, %s71
    %s86 = sphi 0, %s72
    %s90 = sphi 0, %s90
    %s92 = sphi 0, %s90
    %s93 = sphi 0, %s92
    %s107 = sphi 0, %s93
    %s111 = sphi 0, %s111
    %s113 = sphi 0, %s111
    %s114 = sphi 0, %s113
    %s128 = sphi 0, %s114
    %s132 = sphi 0, %s132
    %s134 = sphi 0, %s132
    %s135 = sphi 0, %s134
    %s149 = sphi 0, %s135
    %s153 = sphi 0, %s153
    %s155 = sphi 0, %s153
    %s156 = sphi 0, %s155
    %s170 = sphi 0, %s156
    %s174 = sphi 0, %s174
    %s176 = sphi 0, %s174
    %s177 = sphi 0, %s176
    %s191 = sphi 0, %s177
    %s197 = sphi 0, %s199
    %s200 = sphi 0, %s197
    %s201 = sphi 0, %s200
    %s217 = sphi 0, %s201
  $region4: #{_fused_block.1} parent=0 // loop_header_branch
    %17 = sbr.rel (%p15) target = $region8
  $region5: #{_fused_block.1} parent=0 // loop_body
    %s19 = ssub.s32 %s14, 1
    %s20 = ssub.s32 %s14, 2
    %s21 = sadd.s32 %s14, 1
    %s22 = ssub.s32 %s14, %s21
    %p23 = scmp.eq.s32.totalorder %s22, 0
    %s25 = sadd.s32 %s24, 1
    %s26 = scalar_select %p23, %s24, %s25
    %p29 = pneg %p23
    %p30 = scmp.eq.s32.totalorder %s14, 1
    %p31 = por %p29, %p30
    %p32 = scmp.ne.s32.totalorder %s24, %s27
    %p33 = scmp.eq.s32.totalorder %s14, 0
    %p34 = por %p32, %p33
    %p35 = scmp.ne.s32.totalorder %s24, %s27
    %p36 = scmp.eq.s32.totalorder %s19, 1
    %p37 = por %p35, %p36
    %p38 = scmp.ne.s32.totalorder %s27, %s28
    %p39 = scmp.eq.s32.totalorder %s19, 0
    %p40 = por %p38, %p39
    %p41 = scmp.ne.s32.totalorder %s27, %s28
    %p42 = scmp.eq.s32.totalorder %s20, 1
    %p43 = por %p41, %p42
    %p45 = scmp.ne.s32.totalorder %s28, %s44
    %p46 = scmp.eq.s32.totalorder %s20, 0
    %p47 = por %p45, %p46
    %s49 = sadd.s32 %s48, 1
    %p52 = scmp.eq.s32.totalorder %s14, 1
    %p53 = scmp.ne.s32.totalorder %s48, %s50
    %p54 = scmp.eq.s32.totalorder %s14, 0
    %p55 = por %p53, %p54
    %p56 = scmp.ne.s32.totalorder %s48, %s50
    %p57 = scmp.eq.s32.totalorder %s19, 1
    %p58 = por %p56, %p57
    %p59 = scmp.ne.s32.totalorder %s50, %s51
    %p60 = scmp.eq.s32.totalorder %s19, 0
    %p61 = por %p59, %p60
    %p62 = scmp.ne.s32.totalorder %s50, %s51
    %p63 = scmp.eq.s32.totalorder %s20, 1
    %p64 = por %p62, %p63
    %p66 = scmp.ne.s32.totalorder %s51, %s65
    %p67 = scmp.eq.s32.totalorder %s20, 0
    %p68 = por %p66, %p67
    %s70 = sadd.s32 %s69, 1
    %p73 = scmp.eq.s32.totalorder %s14, 1
    %p74 = scmp.ne.s32.totalorder %s69, %s71
    %p75 = scmp.eq.s32.totalorder %s14, 0
    %p76 = por %p74, %p75
    %p77 = scmp.ne.s32.totalorder %s69, %s71
    %p78 = scmp.eq.s32.totalorder %s19, 1
    %p79 = por %p77, %p78
    %p80 = scmp.ne.s32.totalorder %s71, %s72
    %p81 = scmp.eq.s32.totalorder %s19, 0
    %p82 = por %p80, %p81
    %p83 = scmp.ne.s32.totalorder %s71, %s72
    %p84 = scmp.eq.s32.totalorder %s20, 1
    %p85 = por %p83, %p84
    %p87 = scmp.ne.s32.totalorder %s72, %s86
    %p88 = scmp.eq.s32.totalorder %s20, 0
    %p89 = por %p87, %p88
    %s91 = sadd.s32 %s90, 1
    %p94 = scmp.eq.s32.totalorder %s14, 1
    %p95 = scmp.ne.s32.totalorder %s90, %s92
    %p96 = scmp.eq.s32.totalorder %s14, 0
    %p97 = por %p95, %p96
    %p98 = scmp.ne.s32.totalorder %s90, %s92
    %p99 = scmp.eq.s32.totalorder %s19, 1
    %p100 = por %p98, %p99
    %p101 = scmp.ne.s32.totalorder %s92, %s93
    %p102 = scmp.eq.s32.totalorder %s19, 0
    %p103 = por %p101, %p102
    %p104 = scmp.ne.s32.totalorder %s92, %s93
    %p105 = scmp.eq.s32.totalorder %s20, 1
    %p106 = por %p104, %p105
    %p108 = scmp.ne.s32.totalorder %s93, %s107
    %p109 = scmp.eq.s32.totalorder %s20, 0
    %p110 = por %p108, %p109
    %s112 = sadd.s32 %s111, 1
    %p115 = scmp.eq.s32.totalorder %s14, 1
    %p116 = scmp.ne.s32.totalorder %s111, %s113
    %p117 = scmp.eq.s32.totalorder %s14, 0
    %p118 = por %p116, %p117
    %p119 = scmp.ne.s32.totalorder %s111, %s113
    %p120 = scmp.eq.s32.totalorder %s19, 1
    %p121 = por %p119, %p120
    %p122 = scmp.ne.s32.totalorder %s113, %s114
    %p123 = scmp.eq.s32.totalorder %s19, 0
    %p124 = por %p122, %p123
    %p125 = scmp.ne.s32.totalorder %s113, %s114
    %p126 = scmp.eq.s32.totalorder %s20, 1
    %p127 = por %p125, %p126
    %p129 = scmp.ne.s32.totalorder %s114, %s128
    %p130 = scmp.eq.s32.totalorder %s20, 0
    %p131 = por %p129, %p130
    %s133 = sadd.s32 %s132, 1
    %p136 = scmp.eq.s32.totalorder %s14, 1
    %p137 = scmp.ne.s32.totalorder %s132, %s134
    %p138 = scmp.eq.s32.totalorder %s14, 0
    %p139 = por %p137, %p138
    %p140 = scmp.ne.s32.totalorder %s132, %s134
    %p141 = scmp.eq.s32.totalorder %s19, 1
    %p142 = por %p140, %p141
    %p143 = scmp.ne.s32.totalorder %s134, %s135
    %p144 = scmp.eq.s32.totalorder %s19, 0
    %p145 = por %p143, %p144
    %p146 = scmp.ne.s32.totalorder %s134, %s135
    %p147 = scmp.eq.s32.totalorder %s20, 1
    %p148 = por %p146, %p147
    %p150 = scmp.ne.s32.totalorder %s135, %s149
    %p151 = scmp.eq.s32.totalorder %s20, 0
    %p152 = por %p150, %p151
    %s154 = sadd.s32 %s153, 1
    %p157 = scmp.eq.s32.totalorder %s14, 1
    %p158 = scmp.ne.s32.totalorder %s153, %s155
    %p159 = scmp.eq.s32.totalorder %s14, 0
    %p160 = por %p158, %p159
    %p161 = scmp.ne.s32.totalorder %s153, %s155
    %p162 = scmp.eq.s32.totalorder %s19, 1
    %p163 = por %p161, %p162
    %p164 = scmp.ne.s32.totalorder %s155, %s156
    %p165 = scmp.eq.s32.totalorder %s19, 0
    %p166 = por %p164, %p165
    %p167 = scmp.ne.s32.totalorder %s155, %s156
    %p168 = scmp.eq.s32.totalorder %s20, 1
    %p169 = por %p167, %p168
    %p171 = scmp.ne.s32.totalorder %s156, %s170
    %p172 = scmp.eq.s32.totalorder %s20, 0
    %p173 = por %p171, %p172
    %s175 = sadd.s32 %s174, 1
    %p178 = scmp.eq.s32.totalorder %s14, 1
    %p179 = scmp.ne.s32.totalorder %s174, %s176
    %p180 = scmp.eq.s32.totalorder %s14, 0
    %p181 = por %p179, %p180
    %p182 = scmp.ne.s32.totalorder %s174, %s176
    %p183 = scmp.eq.s32.totalorder %s19, 1
    %p184 = por %p182, %p183
    %p185 = scmp.ne.s32.totalorder %s176, %s177
    %p186 = scmp.eq.s32.totalorder %s19, 0
    %p187 = por %p185, %p186
    %p188 = scmp.ne.s32.totalorder %s176, %s177
    %p189 = scmp.eq.s32.totalorder %s20, 1
    %p190 = por %p188, %p189
    %p192 = scmp.ne.s32.totalorder %s177, %s191
    %p193 = scmp.eq.s32.totalorder %s20, 0
    %p194 = por %p192, %p193
    %s195 = ssub.s32 %s14, %s21
    %p196 = scmp.eq.s32.totalorder %s195, 0
    %s198 = sadd.s32 %s197, 1
    %s199 = scalar_select %p196, %s197, %s198
    %p202 = pneg %p196
    %p203 = scmp.eq.s32.totalorder %s14, 1
    %p204 = por %p202, %p203
    %p205 = scmp.ne.s32.totalorder %s197, %s200
    %p206 = scmp.eq.s32.totalorder %s14, 0
    %p207 = por %p205, %p206
    %p208 = scmp.ne.s32.totalorder %s197, %s200
    %p209 = scmp.eq.s32.totalorder %s19, 1
    %p210 = por %p208, %p209
    %p211 = scmp.ne.s32.totalorder %s200, %s201
    %p212 = scmp.eq.s32.totalorder %s19, 0
    %p213 = por %p211, %p212
    %p214 = scmp.ne.s32.totalorder %s200, %s201
    %p215 = scmp.eq.s32.totalorder %s20, 1
    %p216 = por %p214, %p215
    %p218 = scmp.ne.s32.totalorder %s201, %s217
    %p219 = scmp.eq.s32.totalorder %s20, 0
    %p220 = por %p218, %p219
    %p221 = scmp.le.s32.totalorder 1, %s14
    %p222 = scmp.lt.s32.totalorder %s14, 3
    %p223 = pnand %p221, %p222
    %p224 = pneg %p223
    // Predicated region
    $region9: #{_fused_block.1} parent=5 // pred_check
      _
    $region10: #{_fused_block.1} parent=5 // pred_check_branch
      %226 = sbr.rel (%p223) target = $region12
    $region11: #{_fused_block.1} parent=5 // pred_region
      %s227 = ssub.s32 %s14, 1
      // Predicated region
      $region13: #{_fused_block.1} parent=11 // pred_check
        %p228 = pneg %p61
      $region14: #{_fused_block.1} parent=11 // pred_check_branch
        %230 = sbr.rel (%p228) target = $region16
      $region15: #{_fused_block.1} parent=11 // pred_region
        _
      $region16: #{_fused_block.1} parent=11 // pred_fallthru
        _
      // Predicated region
      $region17: #{_fused_block.1} parent=11 // pred_check
        %p231 = pneg %p82
      $region18: #{_fused_block.1} parent=11 // pred_check_branch
        %233 = sbr.rel (%p231) target = $region20
      $region19: #{_fused_block.1} parent=11 // pred_region
        _
      $region20: #{_fused_block.1} parent=11 // pred_fallthru
        _
      // Predicated region
      $region21: #{_fused_block.1} parent=11 // pred_check
        %p234 = pneg %p103
      $region22: #{_fused_block.1} parent=11 // pred_check_branch
        %236 = sbr.rel (%p234) target = $region24
      $region23: #{_fused_block.1} parent=11 // pred_region
        _
      $region24: #{_fused_block.1} parent=11 // pred_fallthru
        _
      // Predicated region
      $region25: #{_fused_block.1} parent=11 // pred_check
        %p237 = pneg %p124
      $region26: #{_fused_block.1} parent=11 // pred_check_branch
        %239 = sbr.rel (%p237) target = $region28
      $region27: #{_fused_block.1} parent=11 // pred_region
        _
      $region28: #{_fused_block.1} parent=11 // pred_fallthru
        _
      // Predicated region
      $region29: #{_fused_block.1} parent=11 // pred_check
        %p240 = pneg %p145
      $region30: #{_fused_block.1} parent=11 // pred_check_branch
        %242 = sbr.rel (%p240) target = $region32
      $region31: #{_fused_block.1} parent=11 // pred_region
        _
      $region32: #{_fused_block.1} parent=11 // pred_fallthru
        _
      // Predicated region
      $region33: #{_fused_block.1} parent=11 // pred_check
        %p243 = pneg %p166
      $region34: #{_fused_block.1} parent=11 // pred_check_branch
        %245 = sbr.rel (%p243) target = $region36
      $region35: #{_fused_block.1} parent=11 // pred_region
        _
      $region36: #{_fused_block.1} parent=11 // pred_fallthru
        _
      // Predicated region
      $region37: #{_fused_block.1} parent=11 // pred_check
        %p246 = pneg %p187
      $region38: #{_fused_block.1} parent=11 // pred_check_branch
        %248 = sbr.rel (%p246) target = $region40
      $region39: #{_fused_block.1} parent=11 // pred_region
        _
      $region40: #{_fused_block.1} parent=11 // pred_fallthru
        _
    $region12: #{_fused_block.1} parent=5 // pred_fallthru
      _
    %p249 = scmp.lt.s32.totalorder %s14, 2
    // Predicated region
    $region41: #{_fused_block.1} parent=5 // pred_check
      %p250 = pneg %p249
    $region42: #{_fused_block.1} parent=5 // pred_check_branch
      %252 = sbr.rel (%p250) target = $region44
    $region43: #{_fused_block.1} parent=5 // pred_region
      // Predicated region
      $region45: #{_fused_block.1} parent=43 // pred_check
        %p253 = pneg %p34
      $region46: #{_fused_block.1} parent=43 // pred_check_branch
        %255 = sbr.rel (%p253) target = $region48
      $region47: #{_fused_block.1} parent=43 // pred_region
        %p256 = scmp.lt.s32.totalorder %s14, 1
        %s257 = scalar_select %p256, %s14, 1
        %s258 = smul.addr %s257, 4
        %s259 = smul.addr %s258, 8
        %s260 = scalar_lea.vmem %s0, %s259
      $region48: #{_fused_block.1} parent=43 // pred_fallthru
        _
    $region44: #{_fused_block.1} parent=5 // pred_fallthru
      _
    %p261 = scmp.le.s32.totalorder 1, %s14
    %p262 = scmp.lt.s32.totalorder %s14, 3
    %p263 = pnand %p261, %p262
    %p264 = pneg %p263
    // Predicated region
    $region49: #{_fused_block.1} parent=5 // pred_check
      _
    $region50: #{_fused_block.1} parent=5 // pred_check_branch
      %266 = sbr.rel (%p263) target = $region52
    $region51: #{_fused_block.1} parent=5 // pred_region
      %s267 = ssub.s32 %s14, 1
      %p268 = scmp.lt.s32.totalorder %s19, 1
      %s269 = scalar_select %p268, %s19, 1
      %s270 = smul.addr %s269, 4
      %s271 = smul.addr %s270, 8
      %s272 = scalar_lea.vmem %s0, %s271
      %p273 = pneg %p40
      %p274 = pneg %p37
      %p275 = pneg %p61
      %p276 = pneg %p58
      %p277 = pneg %p82
      %p278 = pneg %p79
      %p279 = pneg %p103
      %p280 = pneg %p100
      %p281 = pneg %p124
      %p282 = pneg %p121
      %p283 = pneg %p145
      %p284 = pneg %p142
      %p285 = pneg %p166
      %p286 = pneg %p163
      %p287 = pneg %p187
      %p288 = pneg %p184
      %p289 = pneg %p213
      %p290 = pneg %p210
      %p291 = scmp.lt.s32.totalorder %s19, 1
      %s292 = scalar_select %p291, %s19, 1
      %s293 = smul.addr %s292, 8
      %s294 = smul.addr %s293, 8
      %s295 = scalar_lea.vmem %s8, %s294
      %p296 = scmp.lt.s32.totalorder %s19, 1
      %s297 = scalar_select %p296, %s19, 1
      %s298 = smul.addr %s297, 4
      %s299 = smul.addr %s298, 8
      %s300 = scalar_lea.vmem %s0, %s299
      %p301 = scmp.lt.s32.totalorder %s19, 1
      %s302 = scalar_select %p301, %s19, 1
      %s303 = smul.addr %s302, 8
      %s304 = smul.addr %s303, 8
      %s305 = scalar_lea.vmem %s8, %s304
      %v307 = vld [vmem:[%s300] sm:$0xff]
      %v308 = vld [vmem:[%s300 + $0x8] sm:$0xff]
      %v309 = vld [vmem:[%s300 + $0x10] sm:$0xff]
      %v310 = vld [vmem:[%s300 + $0x18] sm:$0xff]
      %311 = vrot.lane.b32.xlu0 %v307, 17
      %v312 = vpop.permute.xlu0 %311
      %313 = vrot.lane.b32.xlu0 %v309, 17
      %v314 = vpop.permute.xlu0 %313
      %315 = vrot.lane.b32.xlu0 %v308, 17
      %v316 = vpop.permute.xlu0 %315
      %317 = vrot.lane.b32.xlu0 %v310, 17
      %v318 = vpop.permute.xlu0 %317
      %v319 = vlaneseq
      %v320 = vand.u32 %v319, 127
      %vm321 = vcmp.lt.s32.totalorder %v320, 17
      %v322 = vsel %vm321, %v312, %v316
      %v323 = vsel %vm321, %v314, %v318
      %v324 = vsel %vm321, %v316, %v312
      %v325 = vsel %vm321, %v318, %v314
      %v326 = vld [vmem:[%s3] ss:$8 sm:$0x3]
      %v328 = vlaneseq
      %v329 = vshrl.u32 %v328, 7
      %v330 = vsub.s32 0, %v329
      %v331 = vrot.slane %v326, %v330
      %v332 = vlaneseq
      %v333 = vshrl.u32 %v332, 7
      %v334 = vsub.s32 1, %v333
      %v335 = vrot.slane %v326, %v334
      %v338 = vmul.f32 %v324, %v331
      %v339 = vmul.f32 %v322, %v335
      %v340 = vmul.f32 %v325, %v331
      %v341 = vmul.f32 %v323, %v335
      %v342 = vpack.c.bf16 %v340, %v338
      %v343 = vpack.c.bf16 %v341, %v339
      %v346 = vunpack.c.l.b16 %v342
      %v347 = vunpack.c.l.b16 %v343
      %v348 = vunpack.c.h.b16 %v342
      %v349 = vunpack.c.h.b16 %v343
      %v350 = vpack.c.b16 %v347, %v346
      %v351 = vpack.c.b16 %v349, %v348
      %354 = vst [vmem:[#allocation2] sm:$0xff] %v350
      %355 = vst [vmem:[#allocation2 + $0x8] sm:$0xff] %v351
      %356 = vrot.lane.b32.xlu0 %v307, 16
      %v357 = vpop.permute.xlu0 %356
      %358 = vrot.lane.b32.xlu0 %v309, 16
      %v359 = vpop.permute.xlu0 %358
      %360 = vrot.lane.b32.xlu0 %v308, 16
      %v361 = vpop.permute.xlu0 %360
      %362 = vrot.lane.b32.xlu0 %v310, 16
      %v363 = vpop.permute.xlu0 %362
      %vm364 = vcmp.lt.s32.totalorder %v320, 16
      %v365 = vsel %vm364, %v357, %v361
      %v366 = vsel %vm364, %v359, %v363
      %v367 = vsel %vm364, %v361, %v357
      %v368 = vsel %vm364, %v363, %v359
      %s369 = scalar_lea.vmem %s3, 1
      %v370 = vld [vmem:[%s369] ss:$8 sm:$0x3]
      %v372 = vlaneseq
      %v373 = vshrl.u32 %v372, 7
      %v374 = vsub.s32 0, %v373
      %v375 = vrot.slane %v370, %v374
      %v376 = vlaneseq
      %v377 = vshrl.u32 %v376, 7
      %v378 = vsub.s32 1, %v377
      %v379 = vrot.slane %v370, %v378
      %v382 = vmul.f32 %v367, %v375
      %v383 = vmul.f32 %v365, %v379
      %v384 = vmul.f32 %v368, %v375
      %v385 = vmul.f32 %v366, %v379
      %v386 = vpack.c.bf16 %v384, %v382
      %v387 = vpack.c.bf16 %v385, %v383
      %v390 = vunpack.c.l.b16 %v386
      %v391 = vunpack.c.l.b16 %v387
      %v392 = vunpack.c.h.b16 %v386
      %v393 = vunpack.c.h.b16 %v387
      %v394 = vpack.c.b16 %v391, %v390
      %v395 = vpack.c.b16 %v393, %v392
      %398 = vst [vmem:[#allocation2 + $0x10] sm:$0xff] %v394
      %399 = vst [vmem:[#allocation2 + $0x18] sm:$0xff] %v395
      %400 = vrot.lane.b32.xlu0 %v307, 15
      %v401 = vpop.permute.xlu0 %400
      %402 = vrot.lane.b32.xlu0 %v309, 15
      %v403 = vpop.permute.xlu0 %402
      %404 = vrot.lane.b32.xlu0 %v308, 15
      %v405 = vpop.permute.xlu0 %404
      %406 = vrot.lane.b32.xlu0 %v310, 15
      %v407 = vpop.permute.xlu0 %406
      %vm408 = vcmp.lt.s32.totalorder %v320, 15
      %v409 = vsel %vm408, %v401, %v405
      %v410 = vsel %vm408, %v403, %v407
      %v411 = vsel %vm408, %v405, %v401
      %v412 = vsel %vm408, %v407, %v403
      %s413 = scalar_lea.vmem %s3, 2
      %v414 = vld [vmem:[%s413] ss:$8 sm:$0x3]
      %v416 = vlaneseq
      %v417 = vshrl.u32 %v416, 7
      %v418 = vsub.s32 0, %v417
      %v419 = vrot.slane %v414, %v418
      %v420 = vlaneseq
      %v421 = vshrl.u32 %v420, 7
      %v422 = vsub.s32 1, %v421
      %v423 = vrot.slane %v414, %v422
      %v426 = vmul.f32 %v411, %v419
      %v427 = vmul.f32 %v409, %v423
      %v428 = vmul.f32 %v412, %v419
      %v429 = vmul.f32 %v410, %v423
      %v430 = vpack.c.bf16 %v428, %v426
      %v431 = vpack.c.bf16 %v429, %v427
      %v434 = vunpack.c.l.b16 %v430
      %v435 = vunpack.c.l.b16 %v431
      %v436 = vunpack.c.h.b16 %v430
      %v437 = vunpack.c.h.b16 %v431
      %v438 = vpack.c.b16 %v435, %v434
      %v439 = vpack.c.b16 %v437, %v436
      %442 = vst [vmem:[#allocation2 + $0x20] sm:$0xff] %v438
      %443 = vst [vmem:[#allocation2 + $0x28] sm:$0xff] %v439
      %444 = vrot.lane.b32.xlu0 %v307, 1
      %v445 = vpop.permute.xlu0 %444
      %446 = vrot.lane.b32.xlu0 %v309, 1
      %v447 = vpop.permute.xlu0 %446
      %448 = vrot.lane.b32.xlu0 %v308, 1
      %v449 = vpop.permute.xlu0 %448
      %450 = vrot.lane.b32.xlu0 %v310, 1
      %v451 = vpop.permute.xlu0 %450
      %vm452 = vcmp.lt.s32.totalorder %v320, 1
      %v453 = vsel %vm452, %v445, %v449
      %v454 = vsel %vm452, %v447, %v451
      %v455 = vsel %vm452, %v449, %v445
      %v456 = vsel %vm452, %v451, %v447
      %s457 = scalar_lea.vmem %s3, 3
      %v458 = vld [vmem:[%s457] ss:$8 sm:$0x3]
      %v460 = vlaneseq
      %v461 = vshrl.u32 %v460, 7
      %v462 = vsub.s32 0, %v461
      %v463 = vrot.slane %v458, %v462
      %v464 = vlaneseq
      %v465 = vshrl.u32 %v464, 7
      %v466 = vsub.s32 1, %v465
      %v467 = vrot.slane %v458, %v466
      %v470 = vmul.f32 %v455, %v463
      %v471 = vmul.f32 %v453, %v467
      %v472 = vmul.f32 %v456, %v463
      %v473 = vmul.f32 %v454, %v467
      %v474 = vpack.c.bf16 %v472, %v470
      %v475 = vpack.c.bf16 %v473, %v471
      %v478 = vunpack.c.l.b16 %v474
      %v479 = vunpack.c.l.b16 %v475
      %v480 = vunpack.c.h.b16 %v474
      %v481 = vunpack.c.h.b16 %v475
      %v482 = vpack.c.b16 %v479, %v478
      %v483 = vpack.c.b16 %v481, %v480
      %486 = vst [vmem:[#allocation2 + $0x30] sm:$0xff] %v482
      %487 = vst [vmem:[#allocation2 + $0x38] sm:$0xff] %v483
      %v488 = vpack.c.bf16 %v309, %v307
      %v489 = vpack.c.bf16 %v310, %v308
      %v492 = vunpack.c.l.b16 %v488
      %v493 = vunpack.c.l.b16 %v489
      %v494 = vunpack.c.h.b16 %v488
      %v495 = vunpack.c.h.b16 %v489
      %v496 = vpack.c.b16 %v493, %v492
      %v497 = vpack.c.b16 %v495, %v494
      %500 = vst [vmem:[#allocation2 + $0x40] sm:$0xff] %v496
      %501 = vst [vmem:[#allocation2 + $0x48] sm:$0xff] %v497
      %502 = vrot.lane.b32.xlu0 %v307, 127
      %v503 = vpop.permute.xlu0 %502
      %504 = vrot.lane.b32.xlu0 %v309, 127
      %v505 = vpop.permute.xlu0 %504
      %506 = vrot.lane.b32.xlu0 %v308, 127
      %v507 = vpop.permute.xlu0 %506
      %508 = vrot.lane.b32.xlu0 %v310, 127
      %v509 = vpop.permute.xlu0 %508
      %vm510 = vcmp.lt.s32.totalorder %v320, 127
      %v511 = vsel %vm510, %v503, %v507
      %v512 = vsel %vm510, %v505, %v509
      %v513 = vsel %vm510, %v507, %v503
      %v514 = vsel %vm510, %v509, %v505
      %s515 = scalar_lea.vmem %s3, 5
      %v516 = vld [vmem:[%s515] ss:$8 sm:$0x3]
      %v518 = vlaneseq
      %v519 = vshrl.u32 %v518, 7
      %v520 = vsub.s32 0, %v519
      %v521 = vrot.slane %v516, %v520
      %v522 = vlaneseq
      %v523 = vshrl.u32 %v522, 7
      %v524 = vsub.s32 1, %v523
      %v525 = vrot.slane %v516, %v524
      %v528 = vmul.f32 %v511, %v521
      %v529 = vmul.f32 %v513, %v525
      %v530 = vmul.f32 %v512, %v521
      %v531 = vmul.f32 %v514, %v525
      %v532 = vpack.c.bf16 %v530, %v528
      %v533 = vpack.c.bf16 %v531, %v529
      %v536 = vunpack.c.l.b16 %v532
      %v537 = vunpack.c.l.b16 %v533
      %v538 = vunpack.c.h.b16 %v532
      %v539 = vunpack.c.h.b16 %v533
      %v540 = vpack.c.b16 %v537, %v536
      %v541 = vpack.c.b16 %v539, %v538
      %544 = vst [vmem:[#allocation2 + $0x50] sm:$0xff] %v540
      %545 = vst [vmem:[#allocation2 + $0x58] sm:$0xff] %v541
      %546 = vrot.lane.b32.xlu0 %v307, 113
      %v547 = vpop.permute.xlu0 %546
      %548 = vrot.lane.b32.xlu0 %v309, 113
      %v549 = vpop.permute.xlu0 %548
      %550 = vrot.lane.b32.xlu0 %v308, 113
      %v551 = vpop.permute.xlu0 %550
      %552 = vrot.lane.b32.xlu0 %v310, 113
      %v553 = vpop.permute.xlu0 %552
      %vm554 = vcmp.lt.s32.totalorder %v320, 113
      %v555 = vsel %vm554, %v547, %v551
      %v556 = vsel %vm554, %v549, %v553
      %v557 = vsel %vm554, %v551, %v547
      %v558 = vsel %vm554, %v553, %v549
      %s559 = scalar_lea.vmem %s3, 6
      %v560 = vld [vmem:[%s559] ss:$8 sm:$0x3]
      %v562 = vlaneseq
      %v563 = vshrl.u32 %v562, 7
      %v564 = vsub.s32 0, %v563
      %v565 = vrot.slane %v560, %v564
      %v566 = vlaneseq
      %v567 = vshrl.u32 %v566, 7
      %v568 = vsub.s32 1, %v567
      %v569 = vrot.slane %v560, %v568
      %v572 = vmul.f32 %v555, %v565
      %v573 = vmul.f32 %v557, %v569
      %v574 = vmul.f32 %v556, %v565
      %v575 = vmul.f32 %v558, %v569
      %v576 = vpack.c.bf16 %v574, %v572
      %v577 = vpack.c.bf16 %v575, %v573
      %v580 = vunpack.c.l.b16 %v576
      %v581 = vunpack.c.l.b16 %v577
      %v582 = vunpack.c.h.b16 %v576
      %v583 = vunpack.c.h.b16 %v577
      %v584 = vpack.c.b16 %v581, %v580
      %v585 = vpack.c.b16 %v583, %v582
      %588 = vst [vmem:[#allocation2 + $0x60] sm:$0xff] %v584
      %589 = vst [vmem:[#allocation2 + $0x68] sm:$0xff] %v585
      %590 = vrot.lane.b32.xlu0 %v307, 112
      %v591 = vpop.permute.xlu0 %590
      %592 = vrot.lane.b32.xlu0 %v309, 112
      %v593 = vpop.permute.xlu0 %592
      %594 = vrot.lane.b32.xlu0 %v308, 112
      %v595 = vpop.permute.xlu0 %594
      %596 = vrot.lane.b32.xlu0 %v310, 112
      %v597 = vpop.permute.xlu0 %596
      %vm598 = vcmp.lt.s32.totalorder %v320, 112
      %v599 = vsel %vm598, %v591, %v595
      %v600 = vsel %vm598, %v593, %v597
      %v601 = vsel %vm598, %v595, %v591
      %v602 = vsel %vm598, %v597, %v593
      %s603 = scalar_lea.vmem %s3, 7
      %v604 = vld [vmem:[%s603] ss:$8 sm:$0x3]
      %v606 = vlaneseq
      %v607 = vshrl.u32 %v606, 7
      %v608 = vsub.s32 0, %v607
      %v609 = vrot.slane %v604, %v608
      %v610 = vlaneseq
      %v611 = vshrl.u32 %v610, 7
      %v612 = vsub.s32 1, %v611
      %v613 = vrot.slane %v604, %v612
      %v616 = vmul.f32 %v599, %v609
      %v617 = vmul.f32 %v601, %v613
      %v618 = vmul.f32 %v600, %v609
      %v619 = vmul.f32 %v602, %v613
      %v620 = vpack.c.bf16 %v618, %v616
      %v621 = vpack.c.bf16 %v619, %v617
      %v624 = vunpack.c.l.b16 %v620
      %v625 = vunpack.c.l.b16 %v621
      %v626 = vunpack.c.h.b16 %v620
      %v627 = vunpack.c.h.b16 %v621
      %v628 = vpack.c.b16 %v625, %v624
      %v629 = vpack.c.b16 %v627, %v626
      %632 = vst [vmem:[#allocation2 + $0x70] sm:$0xff] %v628
      %633 = vst [vmem:[#allocation2 + $0x78] sm:$0xff] %v629
      %634 = vrot.lane.b32.xlu0 %v307, 111
      %v635 = vpop.permute.xlu0 %634
      %636 = vrot.lane.b32.xlu0 %v309, 111
      %v637 = vpop.permute.xlu0 %636
      %638 = vrot.lane.b32.xlu0 %v308, 111
      %v639 = vpop.permute.xlu0 %638
      %640 = vrot.lane.b32.xlu0 %v310, 111
      %v641 = vpop.permute.xlu0 %640
      %vm642 = vcmp.lt.s32.totalorder %v320, 111
      %v643 = vsel %vm642, %v635, %v639
      %v644 = vsel %vm642, %v637, %v641
      %v645 = vsel %vm642, %v639, %v635
      %v646 = vsel %vm642, %v641, %v637
      %s647 = scalar_lea.vmem %s3, 16
      %v648 = vld [vmem:[%s647] ss:$8 sm:$0x3]
      %v650 = vlaneseq
      %v651 = vshrl.u32 %v650, 7
      %v652 = vsub.s32 0, %v651
      %v653 = vrot.slane %v648, %v652
      %v654 = vlaneseq
      %v655 = vshrl.u32 %v654, 7
      %v656 = vsub.s32 1, %v655
      %v657 = vrot.slane %v648, %v656
      %v660 = vmul.f32 %v643, %v653
      %v661 = vmul.f32 %v645, %v657
      %v662 = vmul.f32 %v644, %v653
      %v663 = vmul.f32 %v646, %v657
      %v664 = vpack.c.bf16 %v662, %v660
      %v665 = vpack.c.bf16 %v663, %v661
      %v668 = vunpack.c.l.b16 %v664
      %v669 = vunpack.c.l.b16 %v665
      %v670 = vunpack.c.h.b16 %v664
      %v671 = vunpack.c.h.b16 %v665
      %v672 = vpack.c.b16 %v669, %v668
      %v673 = vpack.c.b16 %v671, %v670
      %676 = vst [vmem:[#allocation2 + $0x80] sm:$0xff] %v672
      %677 = vst [vmem:[#allocation2 + $0x88] sm:$0xff] %v673
      %v678 = vld [vmem:[%s1] sm:$0xff]
      %v679 = vld [vmem:[%s1 + $0x8] sm:$0xff]
      %v680 = vld [vmem:[%s1 + $0x10] sm:$0xff]
      %v681 = vld [vmem:[%s1 + $0x18] sm:$0xff]
      %v682 = vld [vmem:[#allocation2] sm:$0xff]
      %v683 = vld [vmem:[#allocation2 + $0x8] sm:$0xff]
      %v684 = vld [vmem:[#allocation2 + $0x10] sm:$0xff]
      %v685 = vld [vmem:[#allocation2 + $0x18] sm:$0xff]
      %v686 = vld [vmem:[#allocation2 + $0x20] sm:$0xff]
      %v687 = vld [vmem:[#allocation2 + $0x28] sm:$0xff]
      %v688 = vld [vmem:[#allocation2 + $0x30] sm:$0xff]
      %v689 = vld [vmem:[#allocation2 + $0x38] sm:$0xff]
      %v690 = vld [vmem:[#allocation2 + $0x40] sm:$0xff]
      %v691 = vld [vmem:[#allocation2 + $0x48] sm:$0xff]
      %v692 = vld [vmem:[#allocation2 + $0x50] sm:$0xff]
      %v693 = vld [vmem:[#allocation2 + $0x58] sm:$0xff]
      %v694 = vld [vmem:[#allocation2 + $0x60] sm:$0xff]
      %v695 = vld [vmem:[#allocation2 + $0x68] sm:$0xff]
      %v696 = vld [vmem:[#allocation2 + $0x70] sm:$0xff]
      %v697 = vld [vmem:[#allocation2 + $0x78] sm:$0xff]
      %v698 = vld [vmem:[#allocation2 + $0x80] sm:$0xff]
      %v699 = vld [vmem:[#allocation2 + $0x88] sm:$0xff]
      %v704 = vunpack.c.l.b16 %v678
      %v705 = vunpack.c.h.b16 %v678
      %v706 = vunpack.c.l.b16 %v679
      %v707 = vunpack.c.h.b16 %v679
      %v708 = vunpack.c.l.b16 %v680
      %v709 = vunpack.c.h.b16 %v680
      %v710 = vunpack.c.l.b16 %v681
      %v711 = vunpack.c.h.b16 %v681
      %v712 = vpack.c.b16 %v706, %v704
      %v713 = vpack.c.b16 %v707, %v705
      %v714 = vpack.c.b16 %v710, %v708
      %v715 = vpack.c.b16 %v711, %v709
      %v736 = vunpack.c.l.b16 %v682
      %v737 = vunpack.c.h.b16 %v682
      %v738 = vunpack.c.l.b16 %v683
      %v739 = vunpack.c.h.b16 %v683
      %v740 = vunpack.c.l.b16 %v684
      %v741 = vunpack.c.h.b16 %v684
      %v742 = vunpack.c.l.b16 %v685
      %v743 = vunpack.c.h.b16 %v685
      %v744 = vunpack.c.l.b16 %v686
      %v745 = vunpack.c.h.b16 %v686
      %v746 = vunpack.c.l.b16 %v687
      %v747 = vunpack.c.h.b16 %v687
      %v748 = vunpack.c.l.b16 %v688
      %v749 = vunpack.c.h.b16 %v688
      %v750 = vunpack.c.l.b16 %v689
      %v751 = vunpack.c.h.b16 %v689
      %v752 = vunpack.c.l.b16 %v690
      %v753 = vunpack.c.h.b16 %v690
      %v754 = vunpack.c.l.b16 %v691
      %v755 = vunpack.c.h.b16 %v691
      %v756 = vunpack.c.l.b16 %v692
      %v757 = vunpack.c.h.b16 %v692
      %v758 = vunpack.c.l.b16 %v693
      %v759 = vunpack.c.h.b16 %v693
      %v760 = vunpack.c.l.b16 %v694
      %v761 = vunpack.c.h.b16 %v694
      %v762 = vunpack.c.l.b16 %v695
      %v763 = vunpack.c.h.b16 %v695
      %v764 = vunpack.c.l.b16 %v696
      %v765 = vunpack.c.h.b16 %v696
      %v766 = vunpack.c.l.b16 %v697
      %v767 = vunpack.c.h.b16 %v697
      %v768 = vunpack.c.l.b16 %v698
      %v769 = vunpack.c.h.b16 %v698
      %v770 = vunpack.c.l.b16 %v699
      %v771 = vunpack.c.h.b16 %v699
      %v772 = vpack.c.b16 %v738, %v736
      %v773 = vpack.c.b16 %v739, %v737
      %v774 = vpack.c.b16 %v742, %v740
      %v775 = vpack.c.b16 %v743, %v741
      %v776 = vpack.c.b16 %v746, %v744
      %v777 = vpack.c.b16 %v747, %v745
      %v778 = vpack.c.b16 %v750, %v748
      %v779 = vpack.c.b16 %v751, %v749
      %v780 = vpack.c.b16 %v754, %v752
      %v781 = vpack.c.b16 %v755, %v753
      %v782 = vpack.c.b16 %v758, %v756
      %v783 = vpack.c.b16 %v759, %v757
      %v784 = vpack.c.b16 %v762, %v760
      %v785 = vpack.c.b16 %v763, %v761
      %v786 = vpack.c.b16 %v766, %v764
      %v787 = vpack.c.b16 %v767, %v765
      %v788 = vpack.c.b16 %v770, %v768
      %v789 = vpack.c.b16 %v771, %v769
      %vm808 = vcmask 130048
      %v810 = vsel %vm808, %v713, 0
      %v813 = vsel %vm808, %v715, 0
      %815 = vmatprep.subr.bf16.mxu0 %v787
      %816 = vmatpush1.bf16.msra.mxu0 %v786
      %817 = vmatprep.subr.bf16.mxu0 %v785
      %818 = vmatpush1.bf16.msra.mxu0 %v784
      %819 = vmatprep.subr.bf16.mxu0 %v783
      %820 = vmatpush1.bf16.msra.mxu0 %v782
      %821 = vmatprep.subr.bf16.mxu0 %v781
      %822 = vmatpush1.bf16.msra.mxu0 %v780
      %823 = vmatprep.subr.bf16.mxu0 %v779
      %824 = vmatpush1.bf16.msra.mxu0 %v778
      %825 = vmatprep.subr.bf16.mxu0 %v777
      %826 = vmatpush1.bf16.msra.mxu0 %v776
      %827 = vmatprep.subr.bf16.mxu0 %v775
      %828 = vmatpush1.bf16.msra.mxu0 %v774
      %829 = vmatprep.subr.bf16.mxu0 %v773
      %830 = vmatpush1.bf16.msra.mxu0 %v772
      %831 = vmatprep.subr.bf16.mxu0 0
      %832 = vmatpush2.bf16.msra.mxu0 0
      %833 = vmatprep.subr.bf16.mxu0 0
      %834 = vmatpush2.bf16.msra.mxu0 0
      %835 = vmatprep.subr.bf16.mxu0 0
      %836 = vmatpush2.bf16.msra.mxu0 0
      %837 = vmatprep.subr.bf16.mxu0 0
      %838 = vmatpush2.bf16.msra.mxu0 0
      %839 = vmatprep.subr.bf16.mxu0 0
      %840 = vmatpush2.bf16.msra.mxu0 0
      %841 = vmatprep.subr.bf16.mxu0 0
      %842 = vmatpush2.bf16.msra.mxu0 0
      %843 = vmatprep.subr.bf16.mxu0 0
      %844 = vmatpush2.bf16.msra.mxu0 0
      %845 = vmatprep.subr.bf16.mxu0 %v789
      %846 = vmatpush2.bf16.msra.mxu0 %v788
      %847 = vmatprep.mubr.bf16.mxu0 %v810
      %848 = vmatmul.mubr.bf16.gmra.mxu0 %v712
      %v849 = vpop.f32.mrf.mxu0
      %v850 = vadd.f32 0.0, %v849
      %v851 = vpop.f32.mrf.mxu0
      %v852 = vadd.f32 0.0, %v851
      %v853 = vpop.f32.mrf.mxu0
      %v854 = vadd.f32 0.0, %v853
      %v855 = vpop.f32.mrf.mxu0
      %v856 = vadd.f32 0.0, %v855
      %857 = vmatprep.mubr.bf16.mxu0 %v813
      %858 = vmatmul.mubr.bf16.gmra.mxu0 %v714
      %v859 = vpop.f32.mrf.mxu0
      %v860 = vadd.f32 0.0, %v859
      %v861 = vpop.f32.mrf.mxu0
      %v862 = vadd.f32 0.0, %v861
      %v863 = vpop.f32.mrf.mxu0
      %v864 = vadd.f32 0.0, %v863
      %v865 = vpop.f32.mrf.mxu0
      %v866 = vadd.f32 0.0, %v865
      %867 = vdwg.mxu0
      %v868 = vld [vmem:[%s4] sm:$0xff]
      %v869 = vld [vmem:[%s4 + $0x8] sm:$0xff]
      %v870 = vld [vmem:[%s4 + $0x10] sm:$0xff]
      %v871 = vld [vmem:[%s4 + $0x18] sm:$0xff]
      %v872 = vld [vmem:[%s5] sm:$0xff]
      %v873 = vld [vmem:[%s5 + $0x8] sm:$0xff]
      %v874 = vld [vmem:[%s5 + $0x10] sm:$0xff]
      %v875 = vld [vmem:[%s5 + $0x18] sm:$0xff]
      %v876 = vadd.f32 %v850, %v852
      %877 = vadd.xlane.f32.xlu0 %v876
      %v878 = vpop.xlane.xlu0 %877
      %v879 = vadd.f32 %v854, %v856
      %880 = vadd.xlane.f32.xlu0 %v879
      %v881 = vpop.xlane.xlu0 %880
      %v882 = vadd.f32 %v860, %v862
      %883 = vadd.xlane.f32.xlu0 %v882
      %v884 = vpop.xlane.xlu0 %883
      %v885 = vadd.f32 %v864, %v866
      %886 = vadd.xlane.f32.xlu0 %v885
      %v887 = vpop.xlane.xlu0 %886
      %v888 = vmul.f32 %v878, 0.00390625
      %v889 = vmul.f32 %v881, 0.00390625
      %v890 = vmul.f32 %v884, 0.00390625
      %v891 = vmul.f32 %v887, 0.00390625
      %v892 = vsub.f32 %v850, %v888
      %v893 = vsub.f32 %v852, %v888
      %v894 = vsub.f32 %v854, %v889
      %v895 = vsub.f32 %v856, %v889
      %v896 = vsub.f32 %v860, %v890
      %v897 = vsub.f32 %v862, %v890
      %v898 = vsub.f32 %v864, %v891
      %v899 = vsub.f32 %v866, %v891
      %v900 = vmul.f32 %v892, %v892
      %v901 = vmul.f32 %v893, %v893
      %v902 = vmul.f32 %v894, %v894
      %v903 = vmul.f32 %v895, %v895
      %v904 = vmul.f32 %v896, %v896
      %v905 = vmul.f32 %v897, %v897
      %v906 = vmul.f32 %v898, %v898
      %v907 = vmul.f32 %v899, %v899
      %v908 = vadd.f32 %v900, %v901
      %909 = vadd.xlane.f32.xlu0 %v908
      %v910 = vpop.xlane.xlu0 %909
      %v911 = vadd.f32 %v902, %v903
      %912 = vadd.xlane.f32.xlu0 %v911
      %v913 = vpop.xlane.xlu0 %912
      %v914 = vadd.f32 %v904, %v905
      %915 = vadd.xlane.f32.xlu0 %v914
      %v916 = vpop.xlane.xlu0 %915
      %v917 = vadd.f32 %v906, %v907
      %918 = vadd.xlane.f32.xlu0 %v917
      %v919 = vpop.xlane.xlu0 %918
      %v920 = vmul.f32 %v910, 0.00390625
      %v921 = vmul.f32 %v913, 0.00390625
      %v922 = vmul.f32 %v916, 0.00390625
      %v923 = vmul.f32 %v919, 0.00390625
      %v924 = vadd.f32 %v920, 1e-05
      %v925 = vadd.f32 %v921, 1e-05
      %v926 = vadd.f32 %v922, 1e-05
      %v927 = vadd.f32 %v923, 1e-05
      %v928 = vrsqrt.pop %v924
      %v929 = vrsqrt.pop %v925
      %v930 = vrsqrt.pop %v926
      %v931 = vrsqrt.pop %v927
      %v932 = vmul.f32 %v928, %v868
      %v933 = vmul.f32 %v929, %v869
      %v934 = vmul.f32 %v930, %v870
      %v935 = vmul.f32 %v931, %v871
      %937 = vset.pattern.permute.xlu0 0
      %938 = vperm.xlu0 %937, %v932
      %v939 = vpop.permute.xlu0 %938
      %942 = vset.pattern.permute.xlu0 0
      %943 = vperm.xlu0 %942, %v933
      %v944 = vpop.permute.xlu0 %943
      %947 = vset.pattern.permute.xlu0 0
      %948 = vperm.xlu0 %947, %v934
      %v949 = vpop.permute.xlu0 %948
      %952 = vset.pattern.permute.xlu0 0
      %953 = vperm.xlu0 %952, %v935
      %v954 = vpop.permute.xlu0 %953
      %v956 = vmul.f32 %v892, %v939
      %v957 = vmul.f32 %v893, %v939
      %v958 = vmul.f32 %v894, %v944
      %v959 = vmul.f32 %v895, %v944
      %v960 = vmul.f32 %v896, %v949
      %v961 = vmul.f32 %v897, %v949
      %v962 = vmul.f32 %v898, %v954
      %v963 = vmul.f32 %v899, %v954
      %965 = vset.pattern.permute.xlu0 0
      %966 = vperm.xlu0 %965, %v872
      %v967 = vpop.permute.xlu0 %966
      %970 = vset.pattern.permute.xlu0 0
      %971 = vperm.xlu0 %970, %v873
      %v972 = vpop.permute.xlu0 %971
      %975 = vset.pattern.permute.xlu0 0
      %976 = vperm.xlu0 %975, %v874
      %v977 = vpop.permute.xlu0 %976
      %980 = vset.pattern.permute.xlu0 0
      %981 = vperm.xlu0 %980, %v875
      %v982 = vpop.permute.xlu0 %981
      %v984 = vadd.f32 %v956, %v967
      %v985 = vadd.f32 %v957, %v967
      %v986 = vadd.f32 %v958, %v972
      %v987 = vadd.f32 %v959, %v972
      %v988 = vadd.f32 %v960, %v977
      %v989 = vadd.f32 %v961, %v977
      %v990 = vadd.f32 %v962, %v982
      %v991 = vadd.f32 %v963, %v982
      %v992 = vmax.f32 %v984, 0.0
      %v993 = vmax.f32 %v985, 0.0
      %v994 = vmax.f32 %v986, 0.0
      %v995 = vmax.f32 %v987, 0.0
      %v996 = vmax.f32 %v988, 0.0
      %v997 = vmax.f32 %v989, 0.0
      %v998 = vmax.f32 %v990, 0.0
      %v999 = vmax.f32 %v991, 0.0
      %1000 = vrot.lane.b32.xlu0 %v992, 17
      %v1001 = vpop.permute.xlu0 %1000
      %1002 = vrot.lane.b32.xlu0 %v994, 17
      %v1003 = vpop.permute.xlu0 %1002
      %1004 = vrot.lane.b32.xlu0 %v996, 17
      %v1005 = vpop.permute.xlu0 %1004
      %1006 = vrot.lane.b32.xlu0 %v998, 17
      %v1007 = vpop.permute.xlu0 %1006
      %1008 = vrot.lane.b32.xlu0 %v993, 17
      %v1009 = vpop.permute.xlu0 %1008
      %1010 = vrot.lane.b32.xlu0 %v995, 17
      %v1011 = vpop.permute.xlu0 %1010
      %1012 = vrot.lane.b32.xlu0 %v997, 17
      %v1013 = vpop.permute.xlu0 %1012
      %1014 = vrot.lane.b32.xlu0 %v999, 17
      %v1015 = vpop.permute.xlu0 %1014
      %v1016 = vsel %vm321, %v1001, %v1009
      %v1017 = vsel %vm321, %v1003, %v1011
      %v1018 = vsel %vm321, %v1005, %v1013
      %v1019 = vsel %vm321, %v1007, %v1015
      %v1020 = vsel %vm321, %v1009, %v1001
      %v1021 = vsel %vm321, %v1011, %v1003
      %v1022 = vsel %vm321, %v1013, %v1005
      %v1023 = vsel %vm321, %v1015, %v1007
      %v1024 = vld [vmem:[%s3] ss:$8 sm:$0x3]
      %v1026 = vlaneseq
      %v1027 = vshrl.u32 %v1026, 7
      %v1028 = vsub.s32 0, %v1027
      %v1029 = vrot.slane %v1024, %v1028
      %v1030 = vlaneseq
      %v1031 = vshrl.u32 %v1030, 7
      %v1032 = vsub.s32 1, %v1031
      %v1033 = vrot.slane %v1024, %v1032
      %v1036 = vmul.f32 %v1020, %v1029
      %v1037 = vmul.f32 %v1016, %v1033
      %v1038 = vmul.f32 %v1021, %v1029
      %v1039 = vmul.f32 %v1017, %v1033
      %v1040 = vmul.f32 %v1022, %v1029
      %v1041 = vmul.f32 %v1018, %v1033
      %v1042 = vmul.f32 %v1023, %v1029
      %v1043 = vmul.f32 %v1019, %v1033
      %v1044 = vpack.c.bf16 %v1038, %v1036
      %v1045 = vpack.c.bf16 %v1039, %v1037
      %v1046 = vpack.c.bf16 %v1042, %v1040
      %v1047 = vpack.c.bf16 %v1043, %v1041
      %v1052 = vunpack.c.l.b16 %v1044
      %v1053 = vunpack.c.l.b16 %v1045
      %v1054 = vunpack.c.h.b16 %v1044
      %v1055 = vunpack.c.h.b16 %v1045
      %v1056 = vunpack.c.l.b16 %v1046
      %v1057 = vunpack.c.l.b16 %v1047
      %v1058 = vunpack.c.h.b16 %v1046
      %v1059 = vunpack.c.h.b16 %v1047
      %v1060 = vpack.c.b16 %v1053, %v1052
      %v1061 = vpack.c.b16 %v1055, %v1054
      %v1062 = vpack.c.b16 %v1057, %v1056
      %v1063 = vpack.c.b16 %v1059, %v1058
      %1068 = vst [vmem:[#allocation3] sm:$0xff] %v1060
      %1069 = vst [vmem:[#allocation3 + $0x8] sm:$0xff] %v1061
      %1070 = vst [vmem:[#allocation3 + $0x10] sm:$0xff] %v1062
      %1071 = vst [vmem:[#allocation3 + $0x18] sm:$0xff] %v1063
      %1072 = vrot.lane.b32.xlu0 %v992, 16
      %v1073 = vpop.permute.xlu0 %1072
      %1074 = vrot.lane.b32.xlu0 %v994, 16
      %v1075 = vpop.permute.xlu0 %1074
      %1076 = vrot.lane.b32.xlu0 %v996, 16
      %v1077 = vpop.permute.xlu0 %1076
      %1078 = vrot.lane.b32.xlu0 %v998, 16
      %v1079 = vpop.permute.xlu0 %1078
      %1080 = vrot.lane.b32.xlu0 %v993, 16
      %v1081 = vpop.permute.xlu0 %1080
      %1082 = vrot.lane.b32.xlu0 %v995, 16
      %v1083 = vpop.permute.xlu0 %1082
      %1084 = vrot.lane.b32.xlu0 %v997, 16
      %v1085 = vpop.permute.xlu0 %1084
      %1086 = vrot.lane.b32.xlu0 %v999, 16
      %v1087 = vpop.permute.xlu0 %1086
      %v1088 = vsel %vm364, %v1073, %v1081
      %v1089 = vsel %vm364, %v1075, %v1083
      %v1090 = vsel %vm364, %v1077, %v1085
      %v1091 = vsel %vm364, %v1079, %v1087
      %v1092 = vsel %vm364, %v1081, %v1073
      %v1093 = vsel %vm364, %v1083, %v1075
      %v1094 = vsel %vm364, %v1085, %v1077
      %v1095 = vsel %vm364, %v1087, %v1079
      %v1096 = vld [vmem:[%s369] ss:$8 sm:$0x3]
      %v1098 = vlaneseq
      %v1099 = vshrl.u32 %v1098, 7
      %v1100 = vsub.s32 0, %v1099
      %v1101 = vrot.slane %v1096, %v1100
      %v1102 = vlaneseq
      %v1103 = vshrl.u32 %v1102, 7
      %v1104 = vsub.s32 1, %v1103
      %v1105 = vrot.slane %v1096, %v1104
      %v1108 = vmul.f32 %v1092, %v1101
      %v1109 = vmul.f32 %v1088, %v1105
      %v1110 = vmul.f32 %v1093, %v1101
      %v1111 = vmul.f32 %v1089, %v1105
      %v1112 = vmul.f32 %v1094, %v1101
      %v1113 = vmul.f32 %v1090, %v1105
      %v1114 = vmul.f32 %v1095, %v1101
      %v1115 = vmul.f32 %v1091, %v1105
      %v1116 = vpack.c.bf16 %v1110, %v1108
      %v1117 = vpack.c.bf16 %v1111, %v1109
      %v1118 = vpack.c.bf16 %v1114, %v1112
      %v1119 = vpack.c.bf16 %v1115, %v1113
      %v1124 = vunpack.c.l.b16 %v1116
      %v1125 = vunpack.c.l.b16 %v1117
      %v1126 = vunpack.c.h.b16 %v1116
      %v1127 = vunpack.c.h.b16 %v1117
      %v1128 = vunpack.c.l.b16 %v1118
      %v1129 = vunpack.c.l.b16 %v1119
      %v1130 = vunpack.c.h.b16 %v1118
      %v1131 = vunpack.c.h.b16 %v1119
      %v1132 = vpack.c.b16 %v1125, %v1124
      %v1133 = vpack.c.b16 %v1127, %v1126
      %v1134 = vpack.c.b16 %v1129, %v1128
      %v1135 = vpack.c.b16 %v1131, %v1130
      %1140 = vst [vmem:[#allocation3 + $0x20] sm:$0xff] %v1132
      %1141 = vst [vmem:[#allocation3 + $0x28] sm:$0xff] %v1133
      %1142 = vst [vmem:[#allocation3 + $0x30] sm:$0xff] %v1134
      %1143 = vst [vmem:[#allocation3 + $0x38] sm:$0xff] %v1135
      %1144 = vrot.lane.b32.xlu0 %v992, 15
      %v1145 = vpop.permute.xlu0 %1144
      %1146 = vrot.lane.b32.xlu0 %v994, 15
      %v1147 = vpop.permute.xlu0 %1146
      %1148 = vrot.lane.b32.xlu0 %v996, 15
      %v1149 = vpop.permute.xlu0 %1148
      %1150 = vrot.lane.b32.xlu0 %v998, 15
      %v1151 = vpop.permute.xlu0 %1150
      %1152 = vrot.lane.b32.xlu0 %v993, 15
      %v1153 = vpop.permute.xlu0 %1152
      %1154 = vrot.lane.b32.xlu0 %v995, 15
      %v1155 = vpop.permute.xlu0 %1154
      %1156 = vrot.lane.b32.xlu0 %v997, 15
      %v1157 = vpop.permute.xlu0 %1156
      %1158 = vrot.lane.b32.xlu0 %v999, 15
      %v1159 = vpop.permute.xlu0 %1158
      %v1160 = vsel %vm408, %v1145, %v1153
      %v1161 = vsel %vm408, %v1147, %v1155
      %v1162 = vsel %vm408, %v1149, %v1157
      %v1163 = vsel %vm408, %v1151, %v1159
      %v1164 = vsel %vm408, %v1153, %v1145
      %v1165 = vsel %vm408, %v1155, %v1147
      %v1166 = vsel %vm408, %v1157, %v1149
      %v1167 = vsel %vm408, %v1159, %v1151
      %v1168 = vld [vmem:[%s413] ss:$8 sm:$0x3]
      %v1170 = vlaneseq
      %v1171 = vshrl.u32 %v1170, 7
      %v1172 = vsub.s32 0, %v1171
      %v1173 = vrot.slane %v1168, %v1172
      %v1174 = vlaneseq
      %v1175 = vshrl.u32 %v1174, 7
      %v1176 = vsub.s32 1, %v1175
      %v1177 = vrot.slane %v1168, %v1176
      %v1180 = vmul.f32 %v1164, %v1173
      %v1181 = vmul.f32 %v1160, %v1177
      %v1182 = vmul.f32 %v1165, %v1173
      %v1183 = vmul.f32 %v1161, %v1177
      %v1184 = vmul.f32 %v1166, %v1173
      %v1185 = vmul.f32 %v1162, %v1177
      %v1186 = vmul.f32 %v1167, %v1173
      %v1187 = vmul.f32 %v1163, %v1177
      %v1188 = vpack.c.bf16 %v1182, %v1180
      %v1189 = vpack.c.bf16 %v1183, %v1181
      %v1190 = vpack.c.bf16 %v1186, %v1184
      %v1191 = vpack.c.bf16 %v1187, %v1185
      %v1196 = vunpack.c.l.b16 %v1188
      %v1197 = vunpack.c.l.b16 %v1189
      %v1198 = vunpack.c.h.b16 %v1188
      %v1199 = vunpack.c.h.b16 %v1189
      %v1200 = vunpack.c.l.b16 %v1190
      %v1201 = vunpack.c.l.b16 %v1191
      %v1202 = vunpack.c.h.b16 %v1190
      %v1203 = vunpack.c.h.b16 %v1191
      %v1204 = vpack.c.b16 %v1197, %v1196
      %v1205 = vpack.c.b16 %v1199, %v1198
      %v1206 = vpack.c.b16 %v1201, %v1200
      %v1207 = vpack.c.b16 %v1203, %v1202
      %1212 = vst [vmem:[#allocation3 + $0x40] sm:$0xff] %v1204
      %1213 = vst [vmem:[#allocation3 + $0x48] sm:$0xff] %v1205
      %1214 = vst [vmem:[#allocation3 + $0x50] sm:$0xff] %v1206
      %1215 = vst [vmem:[#allocation3 + $0x58] sm:$0xff] %v1207
      %1216 = vrot.lane.b32.xlu0 %v992, 1
      %v1217 = vpop.permute.xlu0 %1216
      %1218 = vrot.lane.b32.xlu0 %v994, 1
      %v1219 = vpop.permute.xlu0 %1218
      %1220 = vrot.lane.b32.xlu0 %v996, 1
      %v1221 = vpop.permute.xlu0 %1220
      %1222 = vrot.lane.b32.xlu0 %v998, 1
      %v1223 = vpop.permute.xlu0 %1222
      %1224 = vrot.lane.b32.xlu0 %v993, 1
      %v1225 = vpop.permute.xlu0 %1224
      %1226 = vrot.lane.b32.xlu0 %v995, 1
      %v1227 = vpop.permute.xlu0 %1226
      %1228 = vrot.lane.b32.xlu0 %v997, 1
      %v1229 = vpop.permute.xlu0 %1228
      %1230 = vrot.lane.b32.xlu0 %v999, 1
      %v1231 = vpop.permute.xlu0 %1230
      %v1232 = vsel %vm452, %v1217, %v1225
      %v1233 = vsel %vm452, %v1219, %v1227
      %v1234 = vsel %vm452, %v1221, %v1229
      %v1235 = vsel %vm452, %v1223, %v1231
      %v1236 = vsel %vm452, %v1225, %v1217
      %v1237 = vsel %vm452, %v1227, %v1219
      %v1238 = vsel %vm452, %v1229, %v1221
      %v1239 = vsel %vm452, %v1231, %v1223
      %v1240 = vld [vmem:[%s457] ss:$8 sm:$0x3]
      %v1242 = vlaneseq
      %v1243 = vshrl.u32 %v1242, 7
      %v1244 = vsub.s32 0, %v1243
      %v1245 = vrot.slane %v1240, %v1244
      %v1246 = vlaneseq
      %v1247 = vshrl.u32 %v1246, 7
      %v1248 = vsub.s32 1, %v1247
      %v1249 = vrot.slane %v1240, %v1248
      %v1252 = vmul.f32 %v1236, %v1245
      %v1253 = vmul.f32 %v1232, %v1249
      %v1254 = vmul.f32 %v1237, %v1245
      %v1255 = vmul.f32 %v1233, %v1249
      %v1256 = vmul.f32 %v1238, %v1245
      %v1257 = vmul.f32 %v1234, %v1249
      %v1258 = vmul.f32 %v1239, %v1245
      %v1259 = vmul.f32 %v1235, %v1249
      %v1260 = vpack.c.bf16 %v1254, %v1252
      %v1261 = vpack.c.bf16 %v1255, %v1253
      %v1262 = vpack.c.bf16 %v1258, %v1256
      %v1263 = vpack.c.bf16 %v1259, %v1257
      %v1268 = vunpack.c.l.b16 %v1260
      %v1269 = vunpack.c.l.b16 %v1261
      %v1270 = vunpack.c.h.b16 %v1260
      %v1271 = vunpack.c.h.b16 %v1261
      %v1272 = vunpack.c.l.b16 %v1262
      %v1273 = vunpack.c.l.b16 %v1263
      %v1274 = vunpack.c.h.b16 %v1262
      %v1275 = vunpack.c.h.b16 %v1263
      %v1276 = vpack.c.b16 %v1269, %v1268
      %v1277 = vpack.c.b16 %v1271, %v1270
      %v1278 = vpack.c.b16 %v1273, %v1272
      %v1279 = vpack.c.b16 %v1275, %v1274
      %1284 = vst [vmem:[#allocation3 + $0x60] sm:$0xff] %v1276
      %1285 = vst [vmem:[#allocation3 + $0x68] sm:$0xff] %v1277
      %1286 = vst [vmem:[#allocation3 + $0x70] sm:$0xff] %v1278
      %1287 = vst [vmem:[#allocation3 + $0x78] sm:$0xff] %v1279
      %v1288 = vpack.c.bf16 %v994, %v992
      %v1289 = vpack.c.bf16 %v995, %v993
      %v1290 = vpack.c.bf16 %v998, %v996
      %v1291 = vpack.c.bf16 %v999, %v997
      %v1296 = vunpack.c.l.b16 %v1288
      %v1297 = vunpack.c.l.b16 %v1289
      %v1298 = vunpack.c.h.b16 %v1288
      %v1299 = vunpack.c.h.b16 %v1289
      %v1300 = vunpack.c.l.b16 %v1290
      %v1301 = vunpack.c.l.b16 %v1291
      %v1302 = vunpack.c.h.b16 %v1290
      %v1303 = vunpack.c.h.b16 %v1291
      %v1304 = vpack.c.b16 %v1297, %v1296
      %v1305 = vpack.c.b16 %v1299, %v1298
      %v1306 = vpack.c.b16 %v1301, %v1300
      %v1307 = vpack.c.b16 %v1303, %v1302
      %1312 = vst [vmem:[#allocation3 + $0x80] sm:$0xff] %v1304
      %1313 = vst [vmem:[#allocation3 + $0x88] sm:$0xff] %v1305
      %1314 = vst [vmem:[#allocation3 + $0x90] sm:$0xff] %v1306
      %1315 = vst [vmem:[#allocation3 + $0x98] sm:$0xff] %v1307
      %1316 = vrot.lane.b32.xlu0 %v992, 127
      %v1317 = vpop.permute.xlu0 %1316
      %1318 = vrot.lane.b32.xlu0 %v994, 127
      %v1319 = vpop.permute.xlu0 %1318
      %1320 = vrot.lane.b32.xlu0 %v996, 127
      %v1321 = vpop.permute.xlu0 %1320
      %1322 = vrot.lane.b32.xlu0 %v998, 127
      %v1323 = vpop.permute.xlu0 %1322
      %1324 = vrot.lane.b32.xlu0 %v993, 127
      %v1325 = vpop.permute.xlu0 %1324
      %1326 = vrot.lane.b32.xlu0 %v995, 127
      %v1327 = vpop.permute.xlu0 %1326
      %1328 = vrot.lane.b32.xlu0 %v997, 127
      %v1329 = vpop.permute.xlu0 %1328
      %1330 = vrot.lane.b32.xlu0 %v999, 127
      %v1331 = vpop.permute.xlu0 %1330
      %v1332 = vsel %vm510, %v1317, %v1325
      %v1333 = vsel %vm510, %v1319, %v1327
      %v1334 = vsel %vm510, %v1321, %v1329
      %v1335 = vsel %vm510, %v1323, %v1331
      %v1336 = vsel %vm510, %v1325, %v1317
      %v1337 = vsel %vm510, %v1327, %v1319
      %v1338 = vsel %vm510, %v1329, %v1321
      %v1339 = vsel %vm510, %v1331, %v1323
      %v1340 = vld [vmem:[%s515] ss:$8 sm:$0x3]
      %v1342 = vlaneseq
      %v1343 = vshrl.u32 %v1342, 7
      %v1344 = vsub.s32 0, %v1343
      %v1345 = vrot.slane %v1340, %v1344
      %v1346 = vlaneseq
      %v1347 = vshrl.u32 %v1346, 7
      %v1348 = vsub.s32 1, %v1347
      %v1349 = vrot.slane %v1340, %v1348
      %v1352 = vmul.f32 %v1332, %v1345
      %v1353 = vmul.f32 %v1336, %v1349
      %v1354 = vmul.f32 %v1333, %v1345
      %v1355 = vmul.f32 %v1337, %v1349
      %v1356 = vmul.f32 %v1334, %v1345
      %v1357 = vmul.f32 %v1338, %v1349
      %v1358 = vmul.f32 %v1335, %v1345
      %v1359 = vmul.f32 %v1339, %v1349
      %v1360 = vpack.c.bf16 %v1354, %v1352
      %v1361 = vpack.c.bf16 %v1355, %v1353
      %v1362 = vpack.c.bf16 %v1358, %v1356
      %v1363 = vpack.c.bf16 %v1359, %v1357
      %v1368 = vunpack.c.l.b16 %v1360
      %v1369 = vunpack.c.l.b16 %v1361
      %v1370 = vunpack.c.h.b16 %v1360
      %v1371 = vunpack.c.h.b16 %v1361
      %v1372 = vunpack.c.l.b16 %v1362
      %v1373 = vunpack.c.l.b16 %v1363
      %v1374 = vunpack.c.h.b16 %v1362
      %v1375 = vunpack.c.h.b16 %v1363
      %v1376 = vpack.c.b16 %v1369, %v1368
      %v1377 = vpack.c.b16 %v1371, %v1370
      %v1378 = vpack.c.b16 %v1373, %v1372
      %v1379 = vpack.c.b16 %v1375, %v1374
      %1384 = vst [vmem:[#allocation3 + $0xa0] sm:$0xff] %v1376
      %1385 = vst [vmem:[#allocation3 + $0xa8] sm:$0xff] %v1377
      %1386 = vst [vmem:[#allocation3 + $0xb0] sm:$0xff] %v1378
      %1387 = vst [vmem:[#allocation3 + $0xb8] sm:$0xff] %v1379
      %1388 = vrot.lane.b32.xlu0 %v992, 113
      %v1389 = vpop.permute.xlu0 %1388
      %1390 = vrot.lane.b32.xlu0 %v994, 113
      %v1391 = vpop.permute.xlu0 %1390
      %1392 = vrot.lane.b32.xlu0 %v996, 113
      %v1393 = vpop.permute.xlu0 %1392
      %1394 = vrot.lane.b32.xlu0 %v998, 113
      %v1395 = vpop.permute.xlu0 %1394
      %1396 = vrot.lane.b32.xlu0 %v993, 113
      %v1397 = vpop.permute.xlu0 %1396
      %1398 = vrot.lane.b32.xlu0 %v995, 113
      %v1399 = vpop.permute.xlu0 %1398
      %1400 = vrot.lane.b32.xlu0 %v997, 113
      %v1401 = vpop.permute.xlu0 %1400
      %1402 = vrot.lane.b32.xlu0 %v999, 113
      %v1403 = vpop.permute.xlu0 %1402
      %v1404 = vsel %vm554, %v1389, %v1397
      %v1405 = vsel %vm554, %v1391, %v1399
      %v1406 = vsel %vm554, %v1393, %v1401
      %v1407 = vsel %vm554, %v1395, %v1403
      %v1408 = vsel %vm554, %v1397, %v1389
      %v1409 = vsel %vm554, %v1399, %v1391
      %v1410 = vsel %vm554, %v1401, %v1393
      %v1411 = vsel %vm554, %v1403, %v1395
      %v1412 = vld [vmem:[%s559] ss:$8 sm:$0x3]
      %v1414 = vlaneseq
      %v1415 = vshrl.u32 %v1414, 7
      %v1416 = vsub.s32 0, %v1415
      %v1417 = vrot.slane %v1412, %v1416
      %v1418 = vlaneseq
      %v1419 = vshrl.u32 %v1418, 7
      %v1420 = vsub.s32 1, %v1419
      %v1421 = vrot.slane %v1412, %v1420
      %v1424 = vmul.f32 %v1404, %v1417
      %v1425 = vmul.f32 %v1408, %v1421
      %v1426 = vmul.f32 %v1405, %v1417
      %v1427 = vmul.f32 %v1409, %v1421
      %v1428 = vmul.f32 %v1406, %v1417
      %v1429 = vmul.f32 %v1410, %v1421
      %v1430 = vmul.f32 %v1407, %v1417
      %v1431 = vmul.f32 %v1411, %v1421
      %v1432 = vpack.c.bf16 %v1426, %v1424
      %v1433 = vpack.c.bf16 %v1427, %v1425
      %v1434 = vpack.c.bf16 %v1430, %v1428
      %v1435 = vpack.c.bf16 %v1431, %v1429
      %v1440 = vunpack.c.l.b16 %v1432
      %v1441 = vunpack.c.l.b16 %v1433
      %v1442 = vunpack.c.h.b16 %v1432
      %v1443 = vunpack.c.h.b16 %v1433
      %v1444 = vunpack.c.l.b16 %v1434
      %v1445 = vunpack.c.l.b16 %v1435
      %v1446 = vunpack.c.h.b16 %v1434
      %v1447 = vunpack.c.h.b16 %v1435
      %v1448 = vpack.c.b16 %v1441, %v1440
      %v1449 = vpack.c.b16 %v1443, %v1442
      %v1450 = vpack.c.b16 %v1445, %v1444
      %v1451 = vpack.c.b16 %v1447, %v1446
      %1456 = vst [vmem:[#allocation3 + $0xc0] sm:$0xff] %v1448
      %1457 = vst [vmem:[#allocation3 + $0xc8] sm:$0xff] %v1449
      %1458 = vst [vmem:[#allocation3 + $0xd0] sm:$0xff] %v1450
      %1459 = vst [vmem:[#allocation3 + $0xd8] sm:$0xff] %v1451
      %1460 = vrot.lane.b32.xlu0 %v992, 112
      %v1461 = vpop.permute.xlu0 %1460
      %1462 = vrot.lane.b32.xlu0 %v994, 112
      %v1463 = vpop.permute.xlu0 %1462
      %1464 = vrot.lane.b32.xlu0 %v996, 112
      %v1465 = vpop.permute.xlu0 %1464
      %1466 = vrot.lane.b32.xlu0 %v998, 112
      %v1467 = vpop.permute.xlu0 %1466
      %1468 = vrot.lane.b32.xlu0 %v993, 112
      %v1469 = vpop.permute.xlu0 %1468
      %1470 = vrot.lane.b32.xlu0 %v995, 112
      %v1471 = vpop.permute.xlu0 %1470
      %1472 = vrot.lane.b32.xlu0 %v997, 112
      %v1473 = vpop.permute.xlu0 %1472
      %1474 = vrot.lane.b32.xlu0 %v999, 112
      %v1475 = vpop.permute.xlu0 %1474
      %v1476 = vsel %vm598, %v1461, %v1469
      %v1477 = vsel %vm598, %v1463, %v1471
      %v1478 = vsel %vm598, %v1465, %v1473
      %v1479 = vsel %vm598, %v1467, %v1475
      %v1480 = vsel %vm598, %v1469, %v1461
      %v1481 = vsel %vm598, %v1471, %v1463
      %v1482 = vsel %vm598, %v1473, %v1465
      %v1483 = vsel %vm598, %v1475, %v1467
      %v1484 = vld [vmem:[%s603] ss:$8 sm:$0x3]
      %v1486 = vlaneseq
      %v1487 = vshrl.u32 %v1486, 7
      %v1488 = vsub.s32 0, %v1487
      %v1489 = vrot.slane %v1484, %v1488
      %v1490 = vlaneseq
      %v1491 = vshrl.u32 %v1490, 7
      %v1492 = vsub.s32 1, %v1491
      %v1493 = vrot.slane %v1484, %v1492
      %v1496 = vmul.f32 %v1476, %v1489
      %v1497 = vmul.f32 %v1480, %v1493
      %v1498 = vmul.f32 %v1477, %v1489
      %v1499 = vmul.f32 %v1481, %v1493
      %v1500 = vmul.f32 %v1478, %v1489
      %v1501 = vmul.f32 %v1482, %v1493
      %v1502 = vmul.f32 %v1479, %v1489
      %v1503 = vmul.f32 %v1483, %v1493
      %v1504 = vpack.c.bf16 %v1498, %v1496
      %v1505 = vpack.c.bf16 %v1499, %v1497
      %v1506 = vpack.c.bf16 %v1502, %v1500
      %v1507 = vpack.c.bf16 %v1503, %v1501
      %v1512 = vunpack.c.l.b16 %v1504
      %v1513 = vunpack.c.l.b16 %v1505
      %v1514 = vunpack.c.h.b16 %v1504
      %v1515 = vunpack.c.h.b16 %v1505
      %v1516 = vunpack.c.l.b16 %v1506
      %v1517 = vunpack.c.l.b16 %v1507
      %v1518 = vunpack.c.h.b16 %v1506
      %v1519 = vunpack.c.h.b16 %v1507
      %v1520 = vpack.c.b16 %v1513, %v1512
      %v1521 = vpack.c.b16 %v1515, %v1514
      %v1522 = vpack.c.b16 %v1517, %v1516
      %v1523 = vpack.c.b16 %v1519, %v1518
      %1528 = vst [vmem:[#allocation3 + $0xe0] sm:$0xff] %v1520
      %1529 = vst [vmem:[#allocation3 + $0xe8] sm:$0xff] %v1521
      %1530 = vst [vmem:[#allocation3 + $0xf0] sm:$0xff] %v1522
      %1531 = vst [vmem:[#allocation3 + $0xf8] sm:$0xff] %v1523
      %1532 = vrot.lane.b32.xlu0 %v992, 111
      %v1533 = vpop.permute.xlu0 %1532
      %1534 = vrot.lane.b32.xlu0 %v994, 111
      %v1535 = vpop.permute.xlu0 %1534
      %1536 = vrot.lane.b32.xlu0 %v996, 111
      %v1537 = vpop.permute.xlu0 %1536
      %1538 = vrot.lane.b32.xlu0 %v998, 111
      %v1539 = vpop.permute.xlu0 %1538
      %1540 = vrot.lane.b32.xlu0 %v993, 111
      %v1541 = vpop.permute.xlu0 %1540
      %1542 = vrot.lane.b32.xlu0 %v995, 111
      %v1543 = vpop.permute.xlu0 %1542
      %1544 = vrot.lane.b32.xlu0 %v997, 111
      %v1545 = vpop.permute.xlu0 %1544
      %1546 = vrot.lane.b32.xlu0 %v999, 111
      %v1547 = vpop.permute.xlu0 %1546
      %v1548 = vsel %vm642, %v1533, %v1541
      %v1549 = vsel %vm642, %v1535, %v1543
      %v1550 = vsel %vm642, %v1537, %v1545
      %v1551 = vsel %vm642, %v1539, %v1547
      %v1552 = vsel %vm642, %v1541, %v1533
      %v1553 = vsel %vm642, %v1543, %v1535
      %v1554 = vsel %vm642, %v1545, %v1537
      %v1555 = vsel %vm642, %v1547, %v1539
      %v1556 = vld [vmem:[%s647] ss:$8 sm:$0x3]
      %v1558 = vlaneseq
      %v1559 = vshrl.u32 %v1558, 7
      %v1560 = vsub.s32 0, %v1559
      %v1561 = vrot.slane %v1556, %v1560
      %v1562 = vlaneseq
      %v1563 = vshrl.u32 %v1562, 7
      %v1564 = vsub.s32 1, %v1563
      %v1565 = vrot.slane %v1556, %v1564
      %v1568 = vmul.f32 %v1548, %v1561
      %v1569 = vmul.f32 %v1552, %v1565
      %v1570 = vmul.f32 %v1549, %v1561
      %v1571 = vmul.f32 %v1553, %v1565
      %v1572 = vmul.f32 %v1550, %v1561
      %v1573 = vmul.f32 %v1554, %v1565
      %v1574 = vmul.f32 %v1551, %v1561
      %v1575 = vmul.f32 %v1555, %v1565
      %v1576 = vpack.c.bf16 %v1570, %v1568
      %v1577 = vpack.c.bf16 %v1571, %v1569
      %v1578 = vpack.c.bf16 %v1574, %v1572
      %v1579 = vpack.c.bf16 %v1575, %v1573
      %v1584 = vunpack.c.l.b16 %v1576
      %v1585 = vunpack.c.l.b16 %v1577
      %v1586 = vunpack.c.h.b16 %v1576
      %v1587 = vunpack.c.h.b16 %v1577
      %v1588 = vunpack.c.l.b16 %v1578
      %v1589 = vunpack.c.l.b16 %v1579
      %v1590 = vunpack.c.h.b16 %v1578
      %v1591 = vunpack.c.h.b16 %v1579
      %v1592 = vpack.c.b16 %v1585, %v1584
      %v1593 = vpack.c.b16 %v1587, %v1586
      %v1594 = vpack.c.b16 %v1589, %v1588
      %v1595 = vpack.c.b16 %v1591, %v1590
      %1600 = vst [vmem:[#allocation3 + $0x100] sm:$0xff] %v1592
      %1601 = vst [vmem:[#allocation3 + $0x108] sm:$0xff] %v1593
      %1602 = vst [vmem:[#allocation3 + $0x110] sm:$0xff] %v1594
      %1603 = vst [vmem:[#allocation3 + $0x118] sm:$0xff] %v1595
      %v1604 = vld [vmem:[%s2] sm:$0xff]
      %v1605 = vld [vmem:[%s2 + $0x8] sm:$0xf]
      %v1606 = vld [vmem:[%s2 + $0xc] sm:$0xff]
      %v1607 = vld [vmem:[%s2 + $0x14] sm:$0xf]
      %v1608 = vld [vmem:[%s2 + $0x18] sm:$0xff]
      %v1609 = vld [vmem:[%s2 + $0x20] sm:$0xf]
      %v1610 = vld [vmem:[%s2 + $0x24] sm:$0xff]
      %v1611 = vld [vmem:[%s2 + $0x2c] sm:$0xf]
      %v1612 = vld [vmem:[#allocation3] sm:$0xff]
      %v1613 = vld [vmem:[#allocation3 + $0x8] sm:$0xff]
      %v1614 = vld [vmem:[#allocation3 + $0x10] sm:$0xff]
      %v1615 = vld [vmem:[#allocation3 + $0x18] sm:$0xff]
      %v1616 = vld [vmem:[#allocation3 + $0x20] sm:$0xff]
      %v1617 = vld [vmem:[#allocation3 + $0x28] sm:$0xff]
      %v1618 = vld [vmem:[#allocation3 + $0x30] sm:$0xff]
      %v1619 = vld [vmem:[#allocation3 + $0x38] sm:$0xff]
      %v1620 = vld [vmem:[#allocation3 + $0x40] sm:$0xff]
      %v1621 = vld [vmem:[#allocation3 + $0x48] sm:$0xff]
      %v1622 = vld [vmem:[#allocation3 + $0x50] sm:$0xff]
      %v1623 = vld [vmem:[#allocation3 + $0x58] sm:$0xff]
      %v1624 = vld [vmem:[#allocation3 + $0x60] sm:$0xff]
      %v1625 = vld [vmem:[#allocation3 + $0x68] sm:$0xff]
      %v1626 = vld [vmem:[#allocation3 + $0x70] sm:$0xff]
      %v1627 = vld [vmem:[#allocation3 + $0x78] sm:$0xff]
      %v1628 = vld [vmem:[#allocation3 + $0x80] sm:$0xff]
      %v1629 = vld [vmem:[#allocation3 + $0x88] sm:$0xff]
      %v1630 = vld [vmem:[#allocation3 + $0x90] sm:$0xff]
      %v1631 = vld [vmem:[#allocation3 + $0x98] sm:$0xff]
      %v1632 = vld [vmem:[#allocation3 + $0xa0] sm:$0xff]
      %v1633 = vld [vmem:[#allocation3 + $0xa8] sm:$0xff]
      %v1634 = vld [vmem:[#allocation3 + $0xb0] sm:$0xff]
      %v1635 = vld [vmem:[#allocation3 + $0xb8] sm:$0xff]
      %v1636 = vld [vmem:[#allocation3 + $0xc0] sm:$0xff]
      %v1637 = vld [vmem:[#allocation3 + $0xc8] sm:$0xff]
      %v1638 = vld [vmem:[#allocation3 + $0xd0] sm:$0xff]
      %v1639 = vld [vmem:[#allocation3 + $0xd8] sm:$0xff]
      %v1640 = vld [vmem:[#allocation3 + $0xe0] sm:$0xff]
      %v1641 = vld [vmem:[#allocation3 + $0xe8] sm:$0xff]
      %v1642 = vld [vmem:[#allocation3 + $0xf0] sm:$0xff]
      %v1643 = vld [vmem:[#allocation3 + $0xf8] sm:$0xff]
      %v1644 = vld [vmem:[#allocation3 + $0x100] sm:$0xff]
      %v1645 = vld [vmem:[#allocation3 + $0x108] sm:$0xff]
      %v1646 = vld [vmem:[#allocation3 + $0x110] sm:$0xff]
      %v1647 = vld [vmem:[#allocation3 + $0x118] sm:$0xff]
      %v1656 = vunpack.c.l.b16 %v1604
      %v1657 = vunpack.c.h.b16 %v1604
      %v1658 = vunpack.c.l.b16 %v1605
      %v1659 = vunpack.c.l.b16 %v1606
      %v1660 = vunpack.c.h.b16 %v1606
      %v1661 = vunpack.c.l.b16 %v1607
      %v1662 = vunpack.c.l.b16 %v1608
      %v1663 = vunpack.c.h.b16 %v1608
      %v1664 = vunpack.c.l.b16 %v1609
      %v1665 = vunpack.c.l.b16 %v1610
      %v1666 = vunpack.c.h.b16 %v1610
      %v1667 = vunpack.c.l.b16 %v1611
      %v1668 = vpack.c.b16 %v1659, %v1656
      %v1669 = vpack.c.b16 %v1660, %v1657
      %v1670 = vpack.c.b16 %v1661, %v1658
      %v1671 = vpack.c.b16 %v1665, %v1662
      %v1672 = vpack.c.b16 %v1666, %v1663
      %v1673 = vpack.c.b16 %v1667, %v1664
      %v1714 = vunpack.c.l.b16 %v1612
      %v1715 = vunpack.c.h.b16 %v1612
      %v1716 = vunpack.c.l.b16 %v1613
      %v1717 = vunpack.c.h.b16 %v1613
      %v1718 = vunpack.c.l.b16 %v1614
      %v1719 = vunpack.c.h.b16 %v1614
      %v1720 = vunpack.c.l.b16 %v1615
      %v1721 = vunpack.c.h.b16 %v1615
      %v1722 = vunpack.c.l.b16 %v1616
      %v1723 = vunpack.c.h.b16 %v1616
      %v1724 = vunpack.c.l.b16 %v1617
      %v1725 = vunpack.c.h.b16 %v1617
      %v1726 = vunpack.c.l.b16 %v1618
      %v1727 = vunpack.c.h.b16 %v1618
      %v1728 = vunpack.c.l.b16 %v1619
      %v1729 = vunpack.c.h.b16 %v1619
      %v1730 = vunpack.c.l.b16 %v1620
      %v1731 = vunpack.c.h.b16 %v1620
      %v1732 = vunpack.c.l.b16 %v1621
      %v1733 = vunpack.c.h.b16 %v1621
      %v1734 = vunpack.c.l.b16 %v1622
      %v1735 = vunpack.c.h.b16 %v1622
      %v1736 = vunpack.c.l.b16 %v1623
      %v1737 = vunpack.c.h.b16 %v1623
      %v1738 = vunpack.c.l.b16 %v1624
      %v1739 = vunpack.c.h.b16 %v1624
      %v1740 = vunpack.c.l.b16 %v1625
      %v1741 = vunpack.c.h.b16 %v1625
      %v1742 = vunpack.c.l.b16 %v1626
      %v1743 = vunpack.c.h.b16 %v1626
      %v1744 = vunpack.c.l.b16 %v1627
      %v1745 = vunpack.c.h.b16 %v1627
      %v1746 = vunpack.c.l.b16 %v1628
      %v1747 = vunpack.c.h.b16 %v1628
      %v1748 = vunpack.c.l.b16 %v1629
      %v1749 = vunpack.c.h.b16 %v1629
      %v1750 = vunpack.c.l.b16 %v1630
      %v1751 = vunpack.c.h.b16 %v1630
      %v1752 = vunpack.c.l.b16 %v1631
      %v1753 = vunpack.c.h.b16 %v1631
      %v1754 = vunpack.c.l.b16 %v1632
      %v1755 = vunpack.c.h.b16 %v1632
      %v1756 = vunpack.c.l.b16 %v1633
      %v1757 = vunpack.c.h.b16 %v1633
      %v1758 = vunpack.c.l.b16 %v1634
      %v1759 = vunpack.c.h.b16 %v1634
      %v1760 = vunpack.c.l.b16 %v1635
      %v1761 = vunpack.c.h.b16 %v1635
      %v1762 = vunpack.c.l.b16 %v1636
      %v1763 = vunpack.c.h.b16 %v1636
      %v1764 = vunpack.c.l.b16 %v1637
      %v1765 = vunpack.c.h.b16 %v1637
      %v1766 = vunpack.c.l.b16 %v1638
      %v1767 = vunpack.c.h.b16 %v1638
      %v1768 = vunpack.c.l.b16 %v1639
      %v1769 = vunpack.c.h.b16 %v1639
      %v1770 = vunpack.c.l.b16 %v1640
      %v1771 = vunpack.c.h.b16 %v1640
      %v1772 = vunpack.c.l.b16 %v1641
      %v1773 = vunpack.c.h.b16 %v1641
      %v1774 = vunpack.c.l.b16 %v1642
      %v1775 = vunpack.c.h.b16 %v1642
      %v1776 = vunpack.c.l.b16 %v1643
      %v1777 = vunpack.c.h.b16 %v1643
      %v1778 = vunpack.c.l.b16 %v1644
      %v1779 = vunpack.c.h.b16 %v1644
      %v1780 = vunpack.c.l.b16 %v1645
      %v1781 = vunpack.c.h.b16 %v1645
      %v1782 = vunpack.c.l.b16 %v1646
      %v1783 = vunpack.c.h.b16 %v1646
      %v1784 = vunpack.c.l.b16 %v1647
      %v1785 = vunpack.c.h.b16 %v1647
      %v1786 = vpack.c.b16 %v1716, %v1714
      %v1787 = vpack.c.b16 %v1717, %v1715
      %v1788 = vpack.c.b16 %v1720, %v1718
      %v1789 = vpack.c.b16 %v1721, %v1719
      %v1790 = vpack.c.b16 %v1724, %v1722
      %v1791 = vpack.c.b16 %v1725, %v1723
      %v1792 = vpack.c.b16 %v1728, %v1726
      %v1793 = vpack.c.b16 %v1729, %v1727
      %v1794 = vpack.c.b16 %v1732, %v1730
      %v1795 = vpack.c.b16 %v1733, %v1731
      %v1796 = vpack.c.b16 %v1736, %v1734
      %v1797 = vpack.c.b16 %v1737, %v1735
      %v1798 = vpack.c.b16 %v1740, %v1738
      %v1799 = vpack.c.b16 %v1741, %v1739
      %v1800 = vpack.c.b16 %v1744, %v1742
      %v1801 = vpack.c.b16 %v1745, %v1743
      %v1802 = vpack.c.b16 %v1748, %v1746
      %v1803 = vpack.c.b16 %v1749, %v1747
      %v1804 = vpack.c.b16 %v1752, %v1750
      %v1805 = vpack.c.b16 %v1753, %v1751
      %v1806 = vpack.c.b16 %v1756, %v1754
      %v1807 = vpack.c.b16 %v1757, %v1755
      %v1808 = vpack.c.b16 %v1760, %v1758
      %v1809 = vpack.c.b16 %v1761, %v1759
      %v1810 = vpack.c.b16 %v1764, %v1762
      %v1811 = vpack.c.b16 %v1765, %v1763
      %v1812 = vpack.c.b16 %v1768, %v1766
      %v1813 = vpack.c.b16 %v1769, %v1767
      %v1814 = vpack.c.b16 %v1772, %v1770
      %v1815 = vpack.c.b16 %v1773, %v1771
      %v1816 = vpack.c.b16 %v1776, %v1774
      %v1817 = vpack.c.b16 %v1777, %v1775
      %v1818 = vpack.c.b16 %v1780, %v1778
      %v1819 = vpack.c.b16 %v1781, %v1779
      %v1820 = vpack.c.b16 %v1784, %v1782
      %v1821 = vpack.c.b16 %v1785, %v1783
      %vm1858 = vcmask 261120
      %v1860 = vsel %vm1858, %v1670, 0
      %v1863 = vsel %vm1858, %v1673, 0
      %1865 = vmatprep.subr.bf16.mxu0 %v1801
      %1866 = vmatpush1.bf16.msra.mxu0 %v1800
      %1867 = vmatprep.subr.bf16.mxu0 %v1799
      %1868 = vmatpush1.bf16.msra.mxu0 %v1798
      %1869 = vmatprep.subr.bf16.mxu0 %v1797
      %1870 = vmatpush1.bf16.msra.mxu0 %v1796
      %1871 = vmatprep.subr.bf16.mxu0 %v1795
      %1872 = vmatpush1.bf16.msra.mxu0 %v1794
      %1873 = vmatprep.subr.bf16.mxu0 %v1793
      %1874 = vmatpush1.bf16.msra.mxu0 %v1792
      %1875 = vmatprep.subr.bf16.mxu0 %v1791
      %1876 = vmatpush1.bf16.msra.mxu0 %v1790
      %1877 = vmatprep.subr.bf16.mxu0 %v1789
      %1878 = vmatpush1.bf16.msra.mxu0 %v1788
      %1879 = vmatprep.subr.bf16.mxu0 %v1787
      %1880 = vmatpush1.bf16.msra.mxu0 %v1786
      %1881 = vmatprep.subr.bf16.mxu0 %v1817
      %1882 = vmatpush2.bf16.msra.mxu0 %v1816
      %1883 = vmatprep.subr.bf16.mxu0 %v1815
      %1884 = vmatpush2.bf16.msra.mxu0 %v1814
      %1885 = vmatprep.subr.bf16.mxu0 %v1813
      %1886 = vmatpush2.bf16.msra.mxu0 %v1812
      %1887 = vmatprep.subr.bf16.mxu0 %v1811
      %1888 = vmatpush2.bf16.msra.mxu0 %v1810
      %1889 = vmatprep.subr.bf16.mxu0 %v1809
      %1890 = vmatpush2.bf16.msra.mxu0 %v1808
      %1891 = vmatprep.subr.bf16.mxu0 %v1807
      %1892 = vmatpush2.bf16.msra.mxu0 %v1806
      %1893 = vmatprep.subr.bf16.mxu0 %v1805
      %1894 = vmatpush2.bf16.msra.mxu0 %v1804
      %1895 = vmatprep.subr.bf16.mxu0 %v1803
      %1896 = vmatpush2.bf16.msra.mxu0 %v1802
      %1897 = vmatprep.mubr.bf16.mxu0 %v1669
      %1898 = vmatmul.mubr.bf16.gmra.mxu0 %v1668
      %v1899 = vpop.f32.mrf.mxu0
      %v1900 = vadd.f32 0.0, %v1899
      %v1901 = vpop.f32.mrf.mxu0
      %v1902 = vadd.f32 0.0, %v1901
      %v1903 = vpop.f32.mrf.mxu0
      %v1904 = vadd.f32 0.0, %v1903
      %v1905 = vpop.f32.mrf.mxu0
      %v1906 = vadd.f32 0.0, %v1905
      %1907 = vmatprep.mubr.bf16.mxu0 %v1672
      %1908 = vmatmul.mubr.bf16.gmra.mxu0 %v1671
      %v1909 = vpop.f32.mrf.mxu0
      %v1910 = vadd.f32 0.0, %v1909
      %v1911 = vpop.f32.mrf.mxu0
      %v1912 = vadd.f32 0.0, %v1911
      %v1913 = vpop.f32.mrf.mxu0
      %v1914 = vadd.f32 0.0, %v1913
      %v1915 = vpop.f32.mrf.mxu0
      %v1916 = vadd.f32 0.0, %v1915
      %1917 = vdwg.mxu0
      %1918 = vmatprep.subr.bf16.mxu0 0
      %1919 = vmatpush1.bf16.msra.mxu0 0
      %1920 = vmatprep.subr.bf16.mxu0 0
      %1921 = vmatpush1.bf16.msra.mxu0 0
      %1922 = vmatprep.subr.bf16.mxu0 0
      %1923 = vmatpush1.bf16.msra.mxu0 0
      %1924 = vmatprep.subr.bf16.mxu0 0
      %1925 = vmatpush1.bf16.msra.mxu0 0
      %1926 = vmatprep.subr.bf16.mxu0 0
      %1927 = vmatpush1.bf16.msra.mxu0 0
      %1928 = vmatprep.subr.bf16.mxu0 0
      %1929 = vmatpush1.bf16.msra.mxu0 0
      %1930 = vmatprep.subr.bf16.mxu0 %v1821
      %1931 = vmatpush1.bf16.msra.mxu0 %v1820
      %1932 = vmatprep.subr.bf16.mxu0 %v1819
      %1933 = vmatpush1.bf16.msra.mxu0 %v1818
      %1934 = vmatprep.subr.bf16.mxu0 0
      %1935 = vmatpush2.bf16.msra.mxu0 0
      %1936 = vmatprep.subr.bf16.mxu0 0
      %1937 = vmatpush2.bf16.msra.mxu0 0
      %1938 = vmatprep.subr.bf16.mxu0 0
      %1939 = vmatpush2.bf16.msra.mxu0 0
      %1940 = vmatprep.subr.bf16.mxu0 0
      %1941 = vmatpush2.bf16.msra.mxu0 0
      %1942 = vmatprep.subr.bf16.mxu0 0
      %1943 = vmatpush2.bf16.msra.mxu0 0
      %1944 = vmatprep.subr.bf16.mxu0 0
      %1945 = vmatpush2.bf16.msra.mxu0 0
      %1946 = vmatprep.subr.bf16.mxu0 0
      %1947 = vmatpush2.bf16.msra.mxu0 0
      %1948 = vmatprep.subr.bf16.mxu0 0
      %1949 = vmatpush2.bf16.msra.mxu0 0
      %1950 = vmatprep.mubr.bf16.mxu0 0
      %1951 = vmatmul.mubr.bf16.gmra.mxu0 %v1860
      %v1952 = vpop.f32.mrf.mxu0
      %v1953 = vadd.f32 %v1900, %v1952
      %v1954 = vpop.f32.mrf.mxu0
      %v1955 = vadd.f32 %v1902, %v1954
      %v1956 = vpop.f32.mrf.mxu0
      %v1957 = vadd.f32 %v1904, %v1956
      %v1958 = vpop.f32.mrf.mxu0
      %v1959 = vadd.f32 %v1906, %v1958
      %1960 = vmatprep.mubr.bf16.mxu0 0
      %1961 = vmatmul.mubr.bf16.gmra.mxu0 %v1863
      %v1962 = vpop.f32.mrf.mxu0
      %v1963 = vadd.f32 %v1910, %v1962
      %v1964 = vpop.f32.mrf.mxu0
      %v1965 = vadd.f32 %v1912, %v1964
      %v1966 = vpop.f32.mrf.mxu0
      %v1967 = vadd.f32 %v1914, %v1966
      %v1968 = vpop.f32.mrf.mxu0
      %v1969 = vadd.f32 %v1916, %v1968
      %1970 = vdwg.mxu0
      %v1971 = vld [vmem:[%s6] sm:$0xff]
      %v1972 = vld [vmem:[%s6 + $0x8] sm:$0xff]
      %v1973 = vld [vmem:[%s6 + $0x10] sm:$0xff]
      %v1974 = vld [vmem:[%s6 + $0x18] sm:$0xff]
      %v1975 = vld [vmem:[%s7] sm:$0xff]
      %v1976 = vld [vmem:[%s7 + $0x8] sm:$0xff]
      %v1977 = vld [vmem:[%s7 + $0x10] sm:$0xff]
      %v1978 = vld [vmem:[%s7 + $0x18] sm:$0xff]
      %v1979 = vadd.f32 %v1953, %v1955
      %1980 = vadd.xlane.f32.xlu0 %v1979
      %v1981 = vpop.xlane.xlu0 %1980
      %v1982 = vadd.f32 %v1957, %v1959
      %1983 = vadd.xlane.f32.xlu0 %v1982
      %v1984 = vpop.xlane.xlu0 %1983
      %v1985 = vadd.f32 %v1963, %v1965
      %1986 = vadd.xlane.f32.xlu0 %v1985
      %v1987 = vpop.xlane.xlu0 %1986
      %v1988 = vadd.f32 %v1967, %v1969
      %1989 = vadd.xlane.f32.xlu0 %v1988
      %v1990 = vpop.xlane.xlu0 %1989
      %v1991 = vmul.f32 %v1981, 0.00390625
      %v1992 = vmul.f32 %v1984, 0.00390625
      %v1993 = vmul.f32 %v1987, 0.00390625
      %v1994 = vmul.f32 %v1990, 0.00390625
      %v1995 = vsub.f32 %v1953, %v1991
      %v1996 = vsub.f32 %v1955, %v1991
      %v1997 = vsub.f32 %v1957, %v1992
      %v1998 = vsub.f32 %v1959, %v1992
      %v1999 = vsub.f32 %v1963, %v1993
      %v2000 = vsub.f32 %v1965, %v1993
      %v2001 = vsub.f32 %v1967, %v1994
      %v2002 = vsub.f32 %v1969, %v1994
      %v2003 = vmul.f32 %v1995, %v1995
      %v2004 = vmul.f32 %v1996, %v1996
      %v2005 = vmul.f32 %v1997, %v1997
      %v2006 = vmul.f32 %v1998, %v1998
      %v2007 = vmul.f32 %v1999, %v1999
      %v2008 = vmul.f32 %v2000, %v2000
      %v2009 = vmul.f32 %v2001, %v2001
      %v2010 = vmul.f32 %v2002, %v2002
      %v2011 = vadd.f32 %v2003, %v2004
      %2012 = vadd.xlane.f32.xlu0 %v2011
      %v2013 = vpop.xlane.xlu0 %2012
      %v2014 = vadd.f32 %v2005, %v2006
      %2015 = vadd.xlane.f32.xlu0 %v2014
      %v2016 = vpop.xlane.xlu0 %2015
      %v2017 = vadd.f32 %v2007, %v2008
      %2018 = vadd.xlane.f32.xlu0 %v2017
      %v2019 = vpop.xlane.xlu0 %2018
      %v2020 = vadd.f32 %v2009, %v2010
      %2021 = vadd.xlane.f32.xlu0 %v2020
      %v2022 = vpop.xlane.xlu0 %2021
      %v2023 = vmul.f32 %v2013, 0.00390625
      %v2024 = vmul.f32 %v2016, 0.00390625
      %v2025 = vmul.f32 %v2019, 0.00390625
      %v2026 = vmul.f32 %v2022, 0.00390625
      %v2027 = vadd.f32 %v2023, 1e-05
      %v2028 = vadd.f32 %v2024, 1e-05
      %v2029 = vadd.f32 %v2025, 1e-05
      %v2030 = vadd.f32 %v2026, 1e-05
      %v2031 = vrsqrt.pop %v2027
      %v2032 = vrsqrt.pop %v2028
      %v2033 = vrsqrt.pop %v2029
      %v2034 = vrsqrt.pop %v2030
      %v2035 = vmul.f32 %v2031, %v1971
      %v2036 = vmul.f32 %v2032, %v1972
      %v2037 = vmul.f32 %v2033, %v1973
      %v2038 = vmul.f32 %v2034, %v1974
      %2040 = vset.pattern.permute.xlu0 0
      %2041 = vperm.xlu0 %2040, %v2035
      %v2042 = vpop.permute.xlu0 %2041
      %2045 = vset.pattern.permute.xlu0 0
      %2046 = vperm.xlu0 %2045, %v2036
      %v2047 = vpop.permute.xlu0 %2046
      %2050 = vset.pattern.permute.xlu0 0
      %2051 = vperm.xlu0 %2050, %v2037
      %v2052 = vpop.permute.xlu0 %2051
      %2055 = vset.pattern.permute.xlu0 0
      %2056 = vperm.xlu0 %2055, %v2038
      %v2057 = vpop.permute.xlu0 %2056
      %v2059 = vmul.f32 %v1995, %v2042
      %v2060 = vmul.f32 %v1996, %v2042
      %v2061 = vmul.f32 %v1997, %v2047
      %v2062 = vmul.f32 %v1998, %v2047
      %v2063 = vmul.f32 %v1999, %v2052
      %v2064 = vmul.f32 %v2000, %v2052
      %v2065 = vmul.f32 %v2001, %v2057
      %v2066 = vmul.f32 %v2002, %v2057
      %2068 = vset.pattern.permute.xlu0 0
      %2069 = vperm.xlu0 %2068, %v1975
      %v2070 = vpop.permute.xlu0 %2069
      %2073 = vset.pattern.permute.xlu0 0
      %2074 = vperm.xlu0 %2073, %v1976
      %v2075 = vpop.permute.xlu0 %2074
      %2078 = vset.pattern.permute.xlu0 0
      %2079 = vperm.xlu0 %2078, %v1977
      %v2080 = vpop.permute.xlu0 %2079
      %2083 = vset.pattern.permute.xlu0 0
      %2084 = vperm.xlu0 %2083, %v1978
      %v2085 = vpop.permute.xlu0 %2084
      %v2087 = vadd.f32 %v2059, %v2070
      %v2088 = vadd.f32 %v2060, %v2070
      %v2089 = vadd.f32 %v2061, %v2075
      %v2090 = vadd.f32 %v2062, %v2075
      %v2091 = vadd.f32 %v2063, %v2080
      %v2092 = vadd.f32 %v2064, %v2080
      %v2093 = vadd.f32 %v2065, %v2085
      %v2094 = vadd.f32 %v2066, %v2085
      %v2095 = vmax.f32 %v2087, 0.0
      %v2096 = vmax.f32 %v2088, 0.0
      %v2097 = vmax.f32 %v2089, 0.0
      %v2098 = vmax.f32 %v2090, 0.0
      %v2099 = vmax.f32 %v2091, 0.0
      %v2100 = vmax.f32 %v2092, 0.0
      %v2101 = vmax.f32 %v2093, 0.0
      %v2102 = vmax.f32 %v2094, 0.0
      %2103 = vst [vmem:[%s305] sm:$0xff] %v2095
      %2104 = vst [vmem:[%s305 + $0x8] sm:$0xff] %v2096
      %2105 = vst [vmem:[%s305 + $0x10] sm:$0xff] %v2097
      %2106 = vst [vmem:[%s305 + $0x18] sm:$0xff] %v2098
      %2107 = vst [vmem:[%s305 + $0x20] sm:$0xff] %v2099
      %2108 = vst [vmem:[%s305 + $0x28] sm:$0xff] %v2100
      %2109 = vst [vmem:[%s305 + $0x30] sm:$0xff] %v2101
      %2110 = vst [vmem:[%s305 + $0x38] sm:$0xff] %v2102
      %p2111 = scmp.lt.s32.totalorder %s19, 1
      %s2112 = scalar_select %p2111, %s19, 1
      %s2113 = smul.addr %s2112, 8
      %s2114 = smul.addr %s2113, 8
      %s2115 = scalar_lea.vmem %s8, %s2114
      // Predicated region
      $region53: #{_fused_block.1} parent=51 // pred_check
        %p2116 = pneg %p210
      $region54: #{_fused_block.1} parent=51 // pred_check_branch
        %2118 = sbr.rel (%p2116) target = $region56
      $region55: #{_fused_block.1} parent=51 // pred_region
        _
      $region56: #{_fused_block.1} parent=51 // pred_fallthru
        _
    $region52: #{_fused_block.1} parent=5 // pred_fallthru
      _
    %p2119 = scmp.le.s32.totalorder 2, %s14
    // Predicated region
    $region57: #{_fused_block.1} parent=5 // pred_check
      %p2120 = pneg %p2119
    $region58: #{_fused_block.1} parent=5 // pred_check_branch
      %2122 = sbr.rel (%p2120) target = $region60
    $region59: #{_fused_block.1} parent=5 // pred_region
      %s2123 = ssub.s32 %s14, 2
      // Predicated region
      $region61: #{_fused_block.1} parent=59 // pred_check
        %p2124 = pneg %p216
      $region62: #{_fused_block.1} parent=59 // pred_check_branch
        %2126 = sbr.rel (%p2124) target = $region64
      $region63: #{_fused_block.1} parent=59 // pred_region
        %p2127 = scmp.lt.s32.totalorder %s20, 1
        %s2128 = scalar_select %p2127, %s20, 1
        %s2129 = smul.addr %s2128, 8
        %s2130 = smul.addr %s2129, 8
        %s2131 = scalar_lea.vmem %s8, %s2130
      $region64: #{_fused_block.1} parent=59 // pred_fallthru
        _
    $region60: #{_fused_block.1} parent=5 // pred_fallthru
      _
  $region6: #{_fused_block.1} parent=0 // loop_footer
    %s18 = sadd.s32 1, %s14
  $region7: #{_fused_block.1} parent=0 // loop_footer_branch
    %13 = sbr.rel target = $region3
  $region8: #{_fused_block.1} parent=0 // loop_exit
    _

</llo_original>
